<compile_context>
chip_gen: v5e
topology: v5e:2x2
jax: 0.10.0
libtpu: 0.0.40
codegen_flags: <defaults>
</compile_context>

<pallas_src>
import jax
import jax.numpy as jnp
from jax.experimental import pallas as pl
from jax.experimental.pallas import tpu as pltpu

_NEG = -1.0e30  # finite "-inf" for padded class lanes (avoids inf-inf NaN edge cases)


def _round_up(n, m):
    return ((n + m - 1) // m) * m


def _cdiv(a, b):
    return -(-a // b)


# ---------------------------------------------------------------------------
# Kernel body: one (block_b, Fp) batch tile -> (block_b, Cp) log-prob tile.
# Weights/biases are VMEM-resident (constant index_map); x is streamed.
# ---------------------------------------------------------------------------
def mlp_kernel(x_ref, w1_ref, b1_ref, w2_ref, b2_ref, w3_ref, b3_ref, o_ref):
    cdt = w1_ref.dtype                      # bf16 MXU operand dtype
    # x arrives in its native dtype (no host-side pad/cast HBM pass); cast on VPU.
    x = x_ref[...].astype(cdt)

    # ---- layer 1: Linear + ReLU (bf16 MXU operands, f32 accumulate) ----
    # bias-add / ReLU / bf16 downcast fused into a single elementwise pass.
    h1 = jnp.dot(x, w1_ref[...], preferred_element_type=jnp.float32)
    h1 = jnp.maximum(h1 + b1_ref[...], 0.0).astype(cdt)

    # ---- layer 2: Linear + ReLU ----
    h2 = jnp.dot(h1, w2_ref[...], preferred_element_type=jnp.float32)
    h2 = jnp.maximum(h2 + b2_ref[...], 0.0).astype(cdt)

    # ---- layer 3: Linear (logits; class dim padded to a 128-lane multiple) ----
    logits = jnp.dot(h2, w3_ref[...], preferred_element_type=jnp.float32)
    logits = logits + b3_ref[...]           # padded class lanes get -1e30 here

    # ---- log_softmax over the (padded) class dim ----
    # Padded lanes sit at ~-inf: they never win the max and exp() underflows to 0,
    # so the log-sum-exp over real classes is exact.
    m = jnp.max(logits, axis=-1, keepdims=True)
    shifted = logits - m
    lse = jnp.log(jnp.sum(jnp.exp(shifted), axis=-1, keepdims=True))
    o_ref[...] = (shifted - lse).astype(o_ref.dtype)


# ---------------------------------------------------------------------------
# Generation-aware budgets / tiling
# ---------------------------------------------------------------------------
def _tpu_budgets():
    try:
        kind = jax.devices()[0].device_kind.lower()
    except Exception:
        kind = ""
    if "v7" in kind:
        # v7x: 64 MiB VMEM per TensorCore, 2 TCs/chip -> scoped limit <= ~48 MiB,
        # moderate tiles, and >=2 grid steps so the ("parallel",) batch axis is
        # sharded across both cores.
        return dict(vmem_limit=48 * 1024 * 1024, max_block_b=1024, min_grid_steps=2)
    if ("v4" in kind) or ("v5" in kind) or ("v6" in kind):
        # 128 MiB physical VMEM -> large batch tiles, generous scoped limit
        # (v5e's default scoped limit is only 16 MiB, so be explicit).
        return dict(vmem_limit=96 * 1024 * 1024, max_block_b=2048, min_grid_steps=1)
    # Unknown device: conservative defaults that fit any recent TPU.
    return dict(vmem_limit=32 * 1024 * 1024, max_block_b=512, min_grid_steps=1)


def _pick_block_b(B, Fp, x_itemsize, budgets):
    """Batch-tile selection: as large as the generation's VMEM budget allows
    (per-grid-step overhead ~0.35us; deep M tiles feed the MXU better), a
    multiple of 16 rows, rebalanced to minimize padded-row waste, and with
    >= min_grid_steps tiles (v7x: both TensorCores)."""
    max_bb = budgets["max_block_b"]
    vmem_limit = budgets["vmem_limit"]
    min_steps = budgets["min_grid_steps"]

    block = max_bb if B >= max_bb else _round_up(B, 16)

    # Double-buffered x tiles must leave room for the output tile, resident
    # weights and intermediates: cap them at ~half the scoped VMEM limit.
    while block > 16 and 2 * block * Fp * x_itemsize > vmem_limit // 2:
        block = max(16, _round_up(block // 2, 16))

    # v7x: guarantee >= 2 grid steps so both TensorCores get work.
    while min_steps > 1 and block > 16 and _cdiv(B, block) < min_steps:
        block = max(16, _round_up(block // 2, 16))

    # Rebalance: same number of grid steps, equal tiles, minimal padded rows.
    steps = max(min_steps, _cdiv(B, block)) if B > 16 else 1
    block = max(16, _round_up(_cdiv(B, steps), 16))
    return block


# ---------------------------------------------------------------------------
# One-time weight prep (hoisted out of the per-call path)
# ---------------------------------------------------------------------------
def prepare_params(params):
    """Pad every contraction/output dim to a 128-lane multiple and cast weights
    to bf16 (biases stay f32).  Call once; reuse for every forward call."""
    w1, b1, w2, b2, w3, b3 = params
    F_, H1 = w1.shape
    H2 = w2.shape[1]
    C = w3.shape[1]
    Fp = _round_up(F_, 128)
    Hp = _round_up(max(H1, H2), 128)
    Cp = _round_up(C, 128)

    bf16, f32 = jnp.bfloat16, jnp.float32

    def pad2(a, rows, cols, dtype, fill=0.0):
        a = a.astype(dtype)
        return jnp.pad(a, ((0, rows - a.shape[0]), (0, cols - a.shape[1])),
                       constant_values=fill)

    return dict(
        w1=pad2(w1, Fp, Hp, bf16),
        b1=pad2(b1.reshape(1, -1), 1, Hp, f32),
        w2=pad2(w2, Hp, Hp, bf16),
        b2=pad2(b2.reshape(1, -1), 1, Hp, f32),
        w3=pad2(w3, Hp, Cp, bf16),
        b3=pad2(b3.reshape(1, -1), 1, Cp, f32, fill=_NEG),
        dims=(F_, Fp, Hp, C, Cp),
    )


# ---------------------------------------------------------------------------
# Forward
# ---------------------------------------------------------------------------
def neural_network_forward(x, prepared, *, block_b=None):
    """x: (B, C, H, W) or already-flat (B, F).
    `prepared` = prepare_params(params) (raw param tuple also accepted).
    Returns log-probs (B, num_classes)."""
    if isinstance(prepared, (tuple, list)):
        prepared = prepare_params(prepared)         # fallback: prep on the fly
    F_, Fp, Hp, C, Cp = prepared["dims"]

    B = x.shape[0]
    x_flat = x.reshape(B, -1)                       # torch.nn.Flatten (row-major C*H*W)
    assert x_flat.shape[1] == F_, (x_flat.shape, F_)

    budgets = _tpu_budgets()
    if block_b is None:
        block_b = _pick_block_b(B, Fp, x_flat.dtype.itemsize, budgets)
    Bp = _round_up(B, block_b)

    # Pad x only when strictly necessary; otherwise stream it straight from HBM
    # in its native dtype (bf16 cast happens in-kernel), avoiding an extra full
    # HBM write+read pass over the only streamed operand.
    if (Fp != F_) or (Bp != B):
        xp = jnp.zeros((Bp, Fp), x_flat.dtype).at[:B, :F_].set(x_flat)
    else:
        xp = x_flat

    f32 = jnp.float32
    grid = (Bp // block_b,)
    stay = lambda i: (0, 0)         # weights/biases: same block every step -> VMEM-resident

    def run(single_buffer_weights):
        # Resident operands never change block: a second pipeline buffer is pure
        # VMEM waste, so request single buffering when supported.
        wkw = dict(pipeline_mode=pl.Buffered(1)) if single_buffer_weights else {}
        in_specs = [
            pl.BlockSpec((block_b, Fp), lambda i: (i, 0)),   # x: streamed per tile
            pl.BlockSpec((Fp, Hp), stay, **wkw),             # w1 (resident)
            pl.BlockSpec((1, Hp), stay, **wkw),              # b1
            pl.BlockSpec((Hp, Hp), stay, **wkw),             # w2
            pl.BlockSpec((1, Hp), stay, **wkw),              # b2
            pl.BlockSpec((Hp, Cp), stay, **wkw),             # w3
            pl.BlockSpec((1, Cp), stay, **wkw),              # b3
        ]
        out = pl.pallas_call(
            mlp_kernel,
            out_shape=jax.ShapeDtypeStruct((Bp, Cp), f32),
            grid_spec=pltpu.PrefetchScalarGridSpec(
                num_scalar_prefetch=0,
                grid=grid,
                in_specs=in_specs,
                out_specs=pl.BlockSpec((block_b, Cp), lambda i: (i, 0)),
            ),
            compiler_params=pltpu.CompilerParams(
                dimension_semantics=("parallel",),
                vmem_limit_bytes=budgets["vmem_limit"],
            ),
        )(xp, prepared["w1"], prepared["b1"], prepared["w2"], prepared["b2"],
          prepared["w3"], prepared["b3"])
        return jax.block_until_ready(out)

    try:
        out = run(single_buffer_weights=True)
    except Exception:
        # pipeline_mode=pl.Buffered(1) not supported by this JAX version:
        # fall back to default double-buffering (negligible VMEM at these sizes).
        out = run(single_buffer_weights=False)

    # Drop padded batch rows and padded class lanes.
    return out[:B, :C]


# ---------------------------------------------------------------------------
# Init / reference / demo
# ---------------------------------------------------------------------------
def init_params(key, num_features, num_classes, hidden_layer=256):
    """Deterministic init mimicking PyTorch's default Linear init (uniform +-1/sqrt(fan_in)).
    Weights stored as (in, out) so the kernel computes y = x @ W + b."""
    ks = jax.random.split(key, 6)

    def lin(kw, kb, fan_in, fan_out):
        bound = 1.0 / jnp.sqrt(fan_in)
        w = jax.random.uniform(kw, (fan_in, fan_out), jnp.float32, -bound, bound)
        b = jax.random.uniform(kb, (1, fan_out), jnp.float32, -bound, bound)
        return w, b

    w1, b1 = lin(ks[0], ks[1], num_features, hidden_layer)
    w2, b2 = lin(ks[2], ks[3], hidden_layer, hidden_layer)
    w3, b3 = lin(ks[4], ks[5], hidden_layer, num_classes)
    return (w1, b1, w2, b2, w3, b3)


def _reference_forward(x, params):
    """Pure-JAX mirror of the kernel math (bf16 MXU operands, f32 accumulate)."""
    w1, b1, w2, b2, w3, b3 = params
    bf16, f32 = jnp.bfloat16, jnp.float32
    xf = x.reshape(x.shape[0], -1).astype(bf16)
    h1 = jnp.maximum(jnp.dot(xf, w1.astype(bf16), preferred_element_type=f32) + b1, 0.0)
    h2 = jnp.maximum(jnp.dot(h1.astype(bf16), w2.astype(bf16), preferred_element_type=f32) + b2, 0.0)
    logits = jnp.dot(h2.astype(bf16), w3.astype(bf16), preferred_element_type=f32) + b3
    return jax.nn.log_softmax(logits, axis=-1)


if __name__ == "__main__":
    key = jax.random.PRNGKey(0)
    k_x, k_p = jax.random.split(key)

    # small deterministic input, NCHW like PyTorch; flattened inside the wrapper
    B, Cin, Hs, Ws = 2, 4, 16, 16
    num_features = Cin * Hs * Ws          # 1024
    hidden_layer = 128
    num_classes = 10

    x = jax.random.normal(k_x, (B, Cin, Hs, Ws), jnp.float32)
    params = init_params(k_p, num_features, num_classes, hidden_layer)
    prepared = prepare_params(params)     # one-time weight pad + bf16 cast

    out = neural_network_forward(x, prepared)
    jax.block_until_ready(out)

    assert out.shape == (B, num_classes)
    # log_softmax rows should exp-sum to ~1
    row_sums = jnp.sum(jnp.exp(out), axis=1)
    assert jnp.allclose(row_sums, 1.0, atol=1e-3), row_sums
    # match the pure-JAX reference (same bf16/f32 math)
    ref = _reference_forward(x, params)
    assert jnp.allclose(out, ref, atol=1e-2, rtol=1e-2), jnp.max(jnp.abs(out - ref))

    print("KERNEL_OK")
</pallas_src>

<mosaic_0001>
module attributes {stable_mosaic.version = 11 : i64} {
  func.func @mlp_kernel(%arg0: i32, %arg1: memref<16x1024xf32, #tpu.memory_space<vmem>>, %arg2: memref<1024x128xbf16, #tpu.memory_space<vmem>>, %arg3: memref<1x128xf32, #tpu.memory_space<vmem>>, %arg4: memref<128x128xbf16, #tpu.memory_space<vmem>>, %arg5: memref<1x128xf32, #tpu.memory_space<vmem>>, %arg6: memref<128x128xbf16, #tpu.memory_space<vmem>>, %arg7: memref<1x128xf32, #tpu.memory_space<vmem>>, %arg8: memref<16x128xf32, #tpu.memory_space<vmem>>) attributes {dimension_semantics = [#tpu.dimension_semantics<parallel>], iteration_bounds = array<i64: 1>, scalar_prefetch = 0 : i64, scratch_operands = 0 : i64, tpu.core_type = #tpu.core_type<tc>, window_params = [{transform_indices = @transform_0, window_bounds = array<i64: 16, 1024>}, {pipeline_mode = #tpu.pipeline_mode<synchronous>, transform_indices = @transform_1, window_bounds = array<i64: 1024, 128>}, {pipeline_mode = #tpu.pipeline_mode<synchronous>, transform_indices = @transform_2, window_bounds = array<i64: 1, 128>}, {pipeline_mode = #tpu.pipeline_mode<synchronous>, transform_indices = @transform_3, window_bounds = array<i64: 128, 128>}, {pipeline_mode = #tpu.pipeline_mode<synchronous>, transform_indices = @transform_4, window_bounds = array<i64: 1, 128>}, {pipeline_mode = #tpu.pipeline_mode<synchronous>, transform_indices = @transform_5, window_bounds = array<i64: 128, 128>}, {pipeline_mode = #tpu.pipeline_mode<synchronous>, transform_indices = @transform_6, window_bounds = array<i64: 1, 128>}, {transform_indices = @transform_7, window_bounds = array<i64: 16, 128>}]} {
    %c0 = arith.constant 0 : index
    %c0_0 = arith.constant 0 : index
    %0 = vector.load %arg1[%c0, %c0_0] : memref<16x1024xf32, #tpu.memory_space<vmem>>, vector<16x1024xf32>
    %1 = arith.truncf %0 : vector<16x1024xf32> to vector<16x1024xbf16>
    %c0_1 = arith.constant 0 : index
    %c0_2 = arith.constant 0 : index
    %2 = vector.load %arg2[%c0_1, %c0_2] : memref<1024x128xbf16, #tpu.memory_space<vmem>>, vector<1024x128xbf16>
    %cst = arith.constant dense<0.000000e+00> : vector<16x128xf32>
    %3 = tpu.matmul %1, %2, %cst {dimension_numbers = #tpu.dot_dimension_numbers<[1], [0], [0], [1], [0, 0, 1, 1], [], []>} : vector<16x1024xbf16>, vector<1024x128xbf16>, vector<16x128xf32> -> vector<16x128xf32>
    %c0_3 = arith.constant 0 : index
    %c0_4 = arith.constant 0 : index
    %4 = vector.load %arg3[%c0_3, %c0_4] : memref<1x128xf32, #tpu.memory_space<vmem>>, vector<1x128xf32>
    %5 = vector.broadcast %4 : vector<1x128xf32> to vector<16x128xf32>
    %6 = arith.addf %3, %5 : vector<16x128xf32>
    %cst_5 = arith.constant 0.000000e+00 : f32
    %7 = vector.broadcast %cst_5 : f32 to vector<16x128xf32>
    %8 = arith.maximumf %6, %7 : vector<16x128xf32>
    %9 = arith.truncf %8 : vector<16x128xf32> to vector<16x128xbf16>
    %c0_6 = arith.constant 0 : index
    %c0_7 = arith.constant 0 : index
    %10 = vector.load %arg4[%c0_6, %c0_7] : memref<128x128xbf16, #tpu.memory_space<vmem>>, vector<128x128xbf16>
    %cst_8 = arith.constant dense<0.000000e+00> : vector<16x128xf32>
    %11 = tpu.matmul %9, %10, %cst_8 {dimension_numbers = #tpu.dot_dimension_numbers<[1], [0], [0], [1], [0, 0, 1, 1], [], []>} : vector<16x128xbf16>, vector<128x128xbf16>, vector<16x128xf32> -> vector<16x128xf32>
    %c0_9 = arith.constant 0 : index
    %c0_10 = arith.constant 0 : index
    %12 = vector.load %arg5[%c0_9, %c0_10] : memref<1x128xf32, #tpu.memory_space<vmem>>, vector<1x128xf32>
    %13 = vector.broadcast %12 : vector<1x128xf32> to vector<16x128xf32>
    %14 = arith.addf %11, %13 : vector<16x128xf32>
    %cst_11 = arith.constant 0.000000e+00 : f32
    %15 = vector.broadcast %cst_11 : f32 to vector<16x128xf32>
    %16 = arith.maximumf %14, %15 : vector<16x128xf32>
    %17 = arith.truncf %16 : vector<16x128xf32> to vector<16x128xbf16>
    %c0_12 = arith.constant 0 : index
    %c0_13 = arith.constant 0 : index
    %18 = vector.load %arg6[%c0_12, %c0_13] : memref<128x128xbf16, #tpu.memory_space<vmem>>, vector<128x128xbf16>
    %cst_14 = arith.constant dense<0.000000e+00> : vector<16x128xf32>
    %19 = tpu.matmul %17, %18, %cst_14 {dimension_numbers = #tpu.dot_dimension_numbers<[1], [0], [0], [1], [0, 0, 1, 1], [], []>} : vector<16x128xbf16>, vector<128x128xbf16>, vector<16x128xf32> -> vector<16x128xf32>
    %c0_15 = arith.constant 0 : index
    %c0_16 = arith.constant 0 : index
    %20 = vector.load %arg7[%c0_15, %c0_16] : memref<1x128xf32, #tpu.memory_space<vmem>>, vector<1x128xf32>
    %21 = vector.broadcast %20 : vector<1x128xf32> to vector<16x128xf32>
    %22 = arith.addf %19, %21 : vector<16x128xf32>
    %cst_17 = arith.constant dense<0xFF800000> : vector<16xf32>
    %23 = vector.multi_reduction <maximumf>, %22, %cst_17 [1] : vector<16x128xf32> to vector<16xf32>
    %24 = vector.shape_cast %23 : vector<16xf32> to vector<16x1xf32>
    %25 = vector.broadcast %24 : vector<16x1xf32> to vector<16x128xf32>
    %26 = arith.subf %22, %25 : vector<16x128xf32>
    %27 = math.exp %26 : vector<16x128xf32>
    %cst_18 = arith.constant dense<0.000000e+00> : vector<16xf32>
    %28 = vector.multi_reduction <add>, %27, %cst_18 [1] : vector<16x128xf32> to vector<16xf32>
    %29 = vector.shape_cast %28 : vector<16xf32> to vector<16x1xf32>
    %30 = math.log %29 : vector<16x1xf32>
    %31 = vector.broadcast %30 : vector<16x1xf32> to vector<16x128xf32>
    %32 = arith.subf %26, %31 : vector<16x128xf32>
    %c0_19 = arith.constant 0 : index
    %c0_20 = arith.constant 0 : index
    %33 = vector.load %arg8[%c0_19, %c0_20] : memref<16x128xf32, #tpu.memory_space<vmem>>, vector<16x128xf32>
    tpu.vector_store %arg8[%c0_19, %c0_20], %32 {strides = array<i32>} : memref<16x128xf32, #tpu.memory_space<vmem>>, vector<16x128xf32>,
    return
  }
  func.func @transform_0(%arg0: i32) -> (i32, i32) {
    %c0_i32 = arith.constant 0 : i32
    %c0_i32_0 = arith.constant 0 : i32
    return %arg0, %c0_i32 : i32, i32
  }
  func.func @transform_1(%arg0: i32) -> (i32, i32) {
    %c0_i32 = arith.constant 0 : i32
    %c0_i32_0 = arith.constant 0 : i32
    %c0_i32_1 = arith.constant 0 : i32
    return %c0_i32, %c0_i32_0 : i32, i32
  }
  func.func @transform_2(%arg0: i32) -> (i32, i32) {
    %c0_i32 = arith.constant 0 : i32
    %c0_i32_0 = arith.constant 0 : i32
    %c0_i32_1 = arith.constant 0 : i32
    return %c0_i32, %c0_i32_0 : i32, i32
  }
  func.func @transform_3(%arg0: i32) -> (i32, i32) {
    %c0_i32 = arith.constant 0 : i32
    %c0_i32_0 = arith.constant 0 : i32
    %c0_i32_1 = arith.constant 0 : i32
    return %c0_i32, %c0_i32_0 : i32, i32
  }
  func.func @transform_4(%arg0: i32) -> (i32, i32) {
    %c0_i32 = arith.constant 0 : i32
    %c0_i32_0 = arith.constant 0 : i32
    %c0_i32_1 = arith.constant 0 : i32
    return %c0_i32, %c0_i32_0 : i32, i32
  }
  func.func @transform_5(%arg0: i32) -> (i32, i32) {
    %c0_i32 = arith.constant 0 : i32
    %c0_i32_0 = arith.constant 0 : i32
    %c0_i32_1 = arith.constant 0 : i32
    return %c0_i32, %c0_i32_0 : i32, i32
  }
  func.func @transform_6(%arg0: i32) -> (i32, i32) {
    %c0_i32 = arith.constant 0 : i32
    %c0_i32_0 = arith.constant 0 : i32
    %c0_i32_1 = arith.constant 0 : i32
    return %c0_i32, %c0_i32_0 : i32, i32
  }
  func.func @transform_7(%arg0: i32) -> (i32, i32) {
    %c0_i32 = arith.constant 0 : i32
    %c0_i32_0 = arith.constant 0 : i32
    return %arg0, %c0_i32 : i32, i32
  }
}

module attributes {stable_mosaic.version = 11 : i64} {
  func.func @mlp_kernel(%arg0: i32, %arg1: memref<16x1024xf32, #tpu.memory_space<vmem>>, %arg2: memref<1024x128xbf16, #tpu.memory_space<vmem>>, %arg3: memref<1x128xf32, #tpu.memory_space<vmem>>, %arg4: memref<128x128xbf16, #tpu.memory_space<vmem>>, %arg5: memref<1x128xf32, #tpu.memory_space<vmem>>, %arg6: memref<128x128xbf16, #tpu.memory_space<vmem>>, %arg7: memref<1x128xf32, #tpu.memory_space<vmem>>, %arg8: memref<16x128xf32, #tpu.memory_space<vmem>>) attributes {dimension_semantics = [#tpu.dimension_semantics<parallel>], iteration_bounds = array<i64: 1>, scalar_prefetch = 0 : i64, scratch_operands = 0 : i64, tpu.core_type = #tpu.core_type<tc>, window_params = [{transform_indices = @transform_0, window_bounds = array<i64: 16, 1024>}, {pipeline_mode = #tpu.pipeline_mode<synchronous>, transform_indices = @transform_1, window_bounds = array<i64: 1024, 128>}, {pipeline_mode = #tpu.pipeline_mode<synchronous>, transform_indices = @transform_2, window_bounds = array<i64: 1, 128>}, {pipeline_mode = #tpu.pipeline_mode<synchronous>, transform_indices = @transform_3, window_bounds = array<i64: 128, 128>}, {pipeline_mode = #tpu.pipeline_mode<synchronous>, transform_indices = @transform_4, window_bounds = array<i64: 1, 128>}, {pipeline_mode = #tpu.pipeline_mode<synchronous>, transform_indices = @transform_5, window_bounds = array<i64: 128, 128>}, {pipeline_mode = #tpu.pipeline_mode<synchronous>, transform_indices = @transform_6, window_bounds = array<i64: 1, 128>}, {transform_indices = @transform_7, window_bounds = array<i64: 16, 128>}]} {
    %c0 = arith.constant 0 : index
    %c0_0 = arith.constant 0 : index
    %0 = vector.load %arg1[%c0, %c0_0] : memref<16x1024xf32, #tpu.memory_space<vmem>>, vector<16x1024xf32>
    %1 = arith.truncf %0 : vector<16x1024xf32> to vector<16x1024xbf16>
    %c0_1 = arith.constant 0 : index
    %c0_2 = arith.constant 0 : index
    %2 = vector.load %arg2[%c0_1, %c0_2] : memref<1024x128xbf16, #tpu.memory_space<vmem>>, vector<1024x128xbf16>
    %cst = arith.constant dense<0.000000e+00> : vector<16x128xf32>
    %3 = tpu.matmul %1, %2, %cst {dimension_numbers = #tpu.dot_dimension_numbers<[1], [0], [0], [1], [0, 0, 1, 1], [], []>} : vector<16x1024xbf16>, vector<1024x128xbf16>, vector<16x128xf32> -> vector<16x128xf32>
    %c0_3 = arith.constant 0 : index
    %c0_4 = arith.constant 0 : index
    %4 = vector.load %arg3[%c0_3, %c0_4] : memref<1x128xf32, #tpu.memory_space<vmem>>, vector<1x128xf32>
    %5 = vector.broadcast %4 : vector<1x128xf32> to vector<16x128xf32>
    %6 = arith.addf %3, %5 : vector<16x128xf32>
    %cst_5 = arith.constant 0.000000e+00 : f32
    %7 = vector.broadcast %cst_5 : f32 to vector<16x128xf32>
    %8 = arith.maximumf %6, %7 : vector<16x128xf32>
    %9 = arith.truncf %8 : vector<16x128xf32> to vector<16x128xbf16>
    %c0_6 = arith.constant 0 : index
    %c0_7 = arith.constant 0 : index
    %10 = vector.load %arg4[%c0_6, %c0_7] : memref<128x128xbf16, #tpu.memory_space<vmem>>, vector<128x128xbf16>
    %cst_8 = arith.constant dense<0.000000e+00> : vector<16x128xf32>
    %11 = tpu.matmul %9, %10, %cst_8 {dimension_numbers = #tpu.dot_dimension_numbers<[1], [0], [0], [1], [0, 0, 1, 1], [], []>} : vector<16x128xbf16>, vector<128x128xbf16>, vector<16x128xf32> -> vector<16x128xf32>
    %c0_9 = arith.constant 0 : index
    %c0_10 = arith.constant 0 : index
    %12 = vector.load %arg5[%c0_9, %c0_10] : memref<1x128xf32, #tpu.memory_space<vmem>>, vector<1x128xf32>
    %13 = vector.broadcast %12 : vector<1x128xf32> to vector<16x128xf32>
    %14 = arith.addf %11, %13 : vector<16x128xf32>
    %cst_11 = arith.constant 0.000000e+00 : f32
    %15 = vector.broadcast %cst_11 : f32 to vector<16x128xf32>
    %16 = arith.maximumf %14, %15 : vector<16x128xf32>
    %17 = arith.truncf %16 : vector<16x128xf32> to vector<16x128xbf16>
    %c0_12 = arith.constant 0 : index
    %c0_13 = arith.constant 0 : index
    %18 = vector.load %arg6[%c0_12, %c0_13] : memref<128x128xbf16, #tpu.memory_space<vmem>>, vector<128x128xbf16>
    %cst_14 = arith.constant dense<0.000000e+00> : vector<16x128xf32>
    %19 = tpu.matmul %17, %18, %cst_14 {dimension_numbers = #tpu.dot_dimension_numbers<[1], [0], [0], [1], [0, 0, 1, 1], [], []>} : vector<16x128xbf16>, vector<128x128xbf16>, vector<16x128xf32> -> vector<16x128xf32>
    %c0_15 = arith.constant 0 : index
    %c0_16 = arith.constant 0 : index
    %20 = vector.load %arg7[%c0_15, %c0_16] : memref<1x128xf32, #tpu.memory_space<vmem>>, vector<1x128xf32>
    %21 = vector.broadcast %20 : vector<1x128xf32> to vector<16x128xf32>
    %22 = arith.addf %19, %21 : vector<16x128xf32>
    %cst_17 = arith.constant dense<0xFF800000> : vector<16xf32>
    %23 = vector.multi_reduction <maximumf>, %22, %cst_17 [1] : vector<16x128xf32> to vector<16xf32>
    %24 = vector.shape_cast %23 : vector<16xf32> to vector<16x1xf32>
    %25 = vector.broadcast %24 : vector<16x1xf32> to vector<16x128xf32>
    %26 = arith.subf %22, %25 : vector<16x128xf32>
    %27 = math.exp %26 : vector<16x128xf32>
    %cst_18 = arith.constant dense<0.000000e+00> : vector<16xf32>
    %28 = vector.multi_reduction <add>, %27, %cst_18 [1] : vector<16x128xf32> to vector<16xf32>
    %29 = vector.shape_cast %28 : vector<16xf32> to vector<16x1xf32>
    %30 = math.log %29 : vector<16x1xf32>
    %31 = vector.broadcast %30 : vector<16x1xf32> to vector<16x128xf32>
    %32 = arith.subf %26, %31 : vector<16x128xf32>
    %c0_19 = arith.constant 0 : index
    %c0_20 = arith.constant 0 : index
    %33 = vector.load %arg8[%c0_19, %c0_20] : memref<16x128xf32, #tpu.memory_space<vmem>>, vector<16x128xf32>
    tpu.vector_store %arg8[%c0_19, %c0_20], %32 {strides = array<i32>} : memref<16x128xf32, #tpu.memory_space<vmem>>, vector<16x128xf32>,
    return
  }
  func.func @transform_0(%arg0: i32) -> (i32, i32) {
    %c0_i32 = arith.constant 0 : i32
    %c0_i32_0 = arith.constant 0 : i32
    return %arg0, %c0_i32 : i32, i32
  }
  func.func @transform_1(%arg0: i32) -> (i32, i32) {
    %c0_i32 = arith.constant 0 : i32
    %c0_i32_0 = arith.constant 0 : i32
    %c0_i32_1 = arith.constant 0 : i32
    return %c0_i32, %c0_i32_0 : i32, i32
  }
  func.func @transform_2(%arg0: i32) -> (i32, i32) {
    %c0_i32 = arith.constant 0 : i32
    %c0_i32_0 = arith.constant 0 : i32
    %c0_i32_1 = arith.constant 0 : i32
    return %c0_i32, %c0_i32_0 : i32, i32
  }
  func.func @transform_3(%arg0: i32) -> (i32, i32) {
    %c0_i32 = arith.constant 0 : i32
    %c0_i32_0 = arith.constant 0 : i32
    %c0_i32_1 = arith.constant 0 : i32
    return %c0_i32, %c0_i32_0 : i32, i32
  }
  func.func @transform_4(%arg0: i32) -> (i32, i32) {
    %c0_i32 = arith.constant 0 : i32
    %c0_i32_0 = arith.constant 0 : i32
    %c0_i32_1 = arith.constant 0 : i32
    return %c0_i32, %c0_i32_0 : i32, i32
  }
  func.func @transform_5(%arg0: i32) -> (i32, i32) {
    %c0_i32 = arith.constant 0 : i32
    %c0_i32_0 = arith.constant 0 : i32
    %c0_i32_1 = arith.constant 0 : i32
    return %c0_i32, %c0_i32_0 : i32, i32
  }
  func.func @transform_6(%arg0: i32) -> (i32, i32) {
    %c0_i32 = arith.constant 0 : i32
    %c0_i32_0 = arith.constant 0 : i32
    %c0_i32_1 = arith.constant 0 : i32
    return %c0_i32, %c0_i32_0 : i32, i32
  }
  func.func @transform_7(%arg0: i32) -> (i32, i32) {
    %c0_i32 = arith.constant 0 : i32
    %c0_i32_0 = arith.constant 0 : i32
    return %arg0, %c0_i32 : i32, i32
  }
}

</mosaic_0001>

<llo_original>
// kernel: tpu_custom_call.1
$region0: #{tpu_custom_call.1}
  #allocation0 [shape = 'u32[]', space=smem, size = 0x4, offset = 0x4, fixed_abs, tag = 'smem constant byte address 0x4 - core index']
  #allocation1 [shape = 'u32[72,128]{1,0:T(1,128)}', space=vmem, size = 0x9000, scoped, tag = 'internal scratch']
  %s0 = inlined_call_operand.hbm [shape: f32[16,1024], index: 0, kind: input, shape index: {}]
  %s1 = inlined_call_operand.hbm [shape: bf16[1024,128], index: 1, kind: input, shape index: {}]
  %s2 = inlined_call_operand.vmem [shape: f32[1,128], index: 2, kind: input, shape index: {}]
  %s3 = inlined_call_operand.hbm [shape: bf16[128,128], index: 3, kind: input, shape index: {}]
  %s4 = inlined_call_operand.vmem [shape: f32[1,128], index: 4, kind: input, shape index: {}]
  %s5 = inlined_call_operand.hbm [shape: bf16[128,128], index: 5, kind: input, shape index: {}]
  %s6 = inlined_call_operand.vmem [shape: f32[1,128], index: 6, kind: input, shape index: {}]
  %s7 = inlined_call_operand.hbm [shape: f32[16,128], index: 7, kind: output, shape index: {}]
  %s8 = sld [smem:[#allocation0]]
  $region54: #{tpu_custom_call.1} parent=0
    _
  %s10 = ssub.s32 1, %s8
  %s11 = scalar_select 0, %s10, %s8
  $region1: #{tpu_custom_call.1} parent=0
    #allocation2 [shape = 'u8[65536]{0}', space=vmem, size = 0x10000, scoped, tag = 'input window, operand 0, single buffered']
    #allocation3 [shape = 's32[1]{0}', space=sflag, size = 0x4, scoped, tag = 'scoped memory for tpu_custom_call.1']
    #allocation4 [shape = 's32[1]{0}', space=sflag, size = 0x4, scoped, tag = 'scoped memory for tpu_custom_call.1']
    #allocation5 [shape = 'u8[262144]{0}', space=vmem, size = 0x40000, scoped, tag = 'input window, operand 1, single buffered']
    #allocation6 [shape = 's32[1]{0}', space=sflag, size = 0x4, scoped, tag = 'scoped memory for tpu_custom_call.1']
    #allocation7 [shape = 'u8[32768]{0}', space=vmem, size = 0x8000, scoped, tag = 'input window, operand 3, single buffered']
    #allocation8 [shape = 'u8[32768]{0}', space=vmem, size = 0x8000, scoped, tag = 'input window, operand 5, single buffered']
    #allocation9 [shape = 's32[1]{0}', space=sflag, size = 0x4, scoped, tag = 'scoped memory for tpu_custom_call.1']
    #allocation10 [shape = 'u8[8192]{0}', space=vmem, size = 0x2000, scoped, tag = 'output window, operand 0, single buffered']
    %12 = vsyncpa [#allocation3], 0
    %13 = vsyncpa [#allocation6], 0
    %14 = vsyncpa [#allocation9], 0
    %15 = vsyncpa [#allocation4], 0
    // Predicated region
    $region2: #{tpu_custom_call.1} parent=1 // pred_check
      _
    $region3: #{tpu_custom_call.1} parent=1 // pred_check_branch
      %17 = sbr.rel (0) target = $region5
    $region4: #{tpu_custom_call.1} parent=1 // pred_region
      %19 = vsyncadd [#allocation3], 0
      %s20 = sshll.u32 %s0, 4
      %s21 = int_to_ptr.hbm [resolvable:$true] %s20
      %s22 = sshll.u32 [#allocation2], 4
      %s23 = int_to_ptr.vmem [resolvable:$true] %s22
      %28 = dma.hbm_to_vmem [thread:$0]  %s21, 2048, %s23, [#allocation3], 1024, 1024, 64
    $region5: #{tpu_custom_call.1} parent=1 // pred_fallthru
      _
    // Predicated region
    $region6: #{tpu_custom_call.1} parent=1 // pred_check
      _
    $region7: #{tpu_custom_call.1} parent=1 // pred_check_branch
      %30 = sbr.rel (0) target = $region9
    $region8: #{tpu_custom_call.1} parent=1 // pred_region
      %32 = vsyncadd [#allocation6], 0
      %s33 = sshll.u32 %s1, 4
      %s34 = int_to_ptr.hbm [resolvable:$true] %s33
      %s35 = sshll.u32 [#allocation5], 4
      %s36 = int_to_ptr.vmem [resolvable:$true] %s35
      %41 = dma.hbm_to_vmem [thread:$0]  %s34, 8192, %s36, [#allocation6], 64, 64, 4
    $region9: #{tpu_custom_call.1} parent=1 // pred_fallthru
      _
    // Predicated region
    $region10: #{tpu_custom_call.1} parent=1 // pred_check
      _
    $region11: #{tpu_custom_call.1} parent=1 // pred_check_branch
      %43 = sbr.rel (0) target = $region13
    $region12: #{tpu_custom_call.1} parent=1 // pred_region
      _
    $region13: #{tpu_custom_call.1} parent=1 // pred_fallthru
      _
    // Predicated region
    $region14: #{tpu_custom_call.1} parent=1 // pred_check
      _
    $region15: #{tpu_custom_call.1} parent=1 // pred_check_branch
      %45 = sbr.rel (0) target = $region17
    $region16: #{tpu_custom_call.1} parent=1 // pred_region
      %47 = vsyncadd [#allocation6], 0
      %s48 = sshll.u32 %s3, 4
      %s49 = int_to_ptr.hbm [resolvable:$true] %s48
      %s50 = sshll.u32 [#allocation7], 4
      %s51 = int_to_ptr.vmem [resolvable:$true] %s50
      %56 = dma.hbm_to_vmem [thread:$0]  %s49, 1024, %s51, [#allocation6], 64, 64, 4
    $region17: #{tpu_custom_call.1} parent=1 // pred_fallthru
      _
    // Predicated region
    $region18: #{tpu_custom_call.1} parent=1 // pred_check
      _
    $region19: #{tpu_custom_call.1} parent=1 // pred_check_branch
      %58 = sbr.rel (0) target = $region21
    $region20: #{tpu_custom_call.1} parent=1 // pred_region
      _
    $region21: #{tpu_custom_call.1} parent=1 // pred_fallthru
      _
    // Predicated region
    $region22: #{tpu_custom_call.1} parent=1 // pred_check
      _
    $region23: #{tpu_custom_call.1} parent=1 // pred_check_branch
      %60 = sbr.rel (0) target = $region25
    $region24: #{tpu_custom_call.1} parent=1 // pred_region
      %62 = vsyncadd [#allocation9], 0
      %s63 = sshll.u32 %s5, 4
      %s64 = int_to_ptr.hbm [resolvable:$true] %s63
      %s65 = sshll.u32 [#allocation8], 4
      %s66 = int_to_ptr.vmem [resolvable:$true] %s65
      %71 = dma.hbm_to_vmem [thread:$0]  %s64, 1024, %s66, [#allocation9], 64, 64, 4
    $region25: #{tpu_custom_call.1} parent=1 // pred_fallthru
      _
    // Predicated region
    $region26: #{tpu_custom_call.1} parent=1 // pred_check
      _
    $region27: #{tpu_custom_call.1} parent=1 // pred_check_branch
      %73 = sbr.rel (0) target = $region29
    $region28: #{tpu_custom_call.1} parent=1 // pred_region
      _
    $region29: #{tpu_custom_call.1} parent=1 // pred_fallthru
      _
    // Predicated region
    $region30: #{tpu_custom_call.1} parent=1 // pred_check
      _
    $region31: #{tpu_custom_call.1} parent=1 // pred_check_branch
      %75 = sbr.rel (0) target = $region33
    $region32: #{tpu_custom_call.1} parent=1 // pred_region
      %77 = dma.done [#allocation3], 2048
    $region33: #{tpu_custom_call.1} parent=1 // pred_fallthru
      _
    // Predicated region
    $region34: #{tpu_custom_call.1} parent=1 // pred_check
      _
    $region35: #{tpu_custom_call.1} parent=1 // pred_check_branch
      %79 = sbr.rel (0) target = $region37
    $region36: #{tpu_custom_call.1} parent=1 // pred_region
      %81 = dma.done [#allocation6], 8192
    $region37: #{tpu_custom_call.1} parent=1 // pred_fallthru
      _
    // Predicated region
    $region38: #{tpu_custom_call.1} parent=1 // pred_check
      _
    $region39: #{tpu_custom_call.1} parent=1 // pred_check_branch
      %83 = sbr.rel (0) target = $region41
    $region40: #{tpu_custom_call.1} parent=1 // pred_region
      %85 = dma.done [#allocation6], 1024
    $region41: #{tpu_custom_call.1} parent=1 // pred_fallthru
      _
    // Predicated region
    $region42: #{tpu_custom_call.1} parent=1 // pred_check
      _
    $region43: #{tpu_custom_call.1} parent=1 // pred_check_branch
      %87 = sbr.rel (0) target = $region45
    $region44: #{tpu_custom_call.1} parent=1 // pred_region
      %89 = dma.done [#allocation9], 1024
    $region45: #{tpu_custom_call.1} parent=1 // pred_fallthru
      _
    %v90 = vld [vmem:[#allocation2] sm:$0xff]
    %v91 = vld [vmem:[#allocation2 + $0x8] sm:$0xff]
    %v92 = vld [vmem:[#allocation2 + $0x10] sm:$0xff]
    %v93 = vld [vmem:[#allocation2 + $0x18] sm:$0xff]
    %v94 = vld [vmem:[#allocation2 + $0x20] sm:$0xff]
    %v95 = vld [vmem:[#allocation2 + $0x28] sm:$0xff]
    %v96 = vld [vmem:[#allocation2 + $0x30] sm:$0xff]
    %v97 = vld [vmem:[#allocation2 + $0x38] sm:$0xff]
    %v98 = vld [vmem:[#allocation2 + $0x40] sm:$0xff]
    %v99 = vld [vmem:[#allocation2 + $0x48] sm:$0xff]
    %v100 = vld [vmem:[#allocation2 + $0x50] sm:$0xff]
    %v101 = vld [vmem:[#allocation2 + $0x58] sm:$0xff]
    %v102 = vld [vmem:[#allocation2 + $0x60] sm:$0xff]
    %v103 = vld [vmem:[#allocation2 + $0x68] sm:$0xff]
    %v104 = vld [vmem:[#allocation2 + $0x70] sm:$0xff]
    %v105 = vld [vmem:[#allocation2 + $0x78] sm:$0xff]
    %v106 = vpack.c.bf16 %v98, %v90
    %v107 = vpack.c.bf16 %v99, %v91
    %v108 = vpack.c.bf16 %v100, %v92
    %v109 = vpack.c.bf16 %v101, %v93
    %v110 = vpack.c.bf16 %v102, %v94
    %v111 = vpack.c.bf16 %v103, %v95
    %v112 = vpack.c.bf16 %v104, %v96
    %v113 = vpack.c.bf16 %v105, %v97
    %v114 = vld [vmem:[#allocation5] sm:$0xf]
    %v115 = vld [vmem:[#allocation5 + $0x4] sm:$0xf]
    %v116 = vld [vmem:[#allocation5 + $0x8] sm:$0xf]
    %v117 = vld [vmem:[#allocation5 + $0xc] sm:$0xf]
    %v118 = vld [vmem:[#allocation5 + $0x10] sm:$0xf]
    %v119 = vld [vmem:[#allocation5 + $0x14] sm:$0xf]
    %v120 = vld [vmem:[#allocation5 + $0x18] sm:$0xf]
    %v121 = vld [vmem:[#allocation5 + $0x1c] sm:$0xf]
    %v122 = vld [vmem:[#allocation5 + $0x20] sm:$0xf]
    %v123 = vld [vmem:[#allocation5 + $0x24] sm:$0xf]
    %v124 = vld [vmem:[#allocation5 + $0x28] sm:$0xf]
    %v125 = vld [vmem:[#allocation5 + $0x2c] sm:$0xf]
    %v126 = vld [vmem:[#allocation5 + $0x30] sm:$0xf]
    %v127 = vld [vmem:[#allocation5 + $0x34] sm:$0xf]
    %v128 = vld [vmem:[#allocation5 + $0x38] sm:$0xf]
    %v129 = vld [vmem:[#allocation5 + $0x3c] sm:$0xf]
    %v130 = vld [vmem:[#allocation5 + $0x40] sm:$0xf]
    %v131 = vld [vmem:[#allocation5 + $0x44] sm:$0xf]
    %v132 = vld [vmem:[#allocation5 + $0x48] sm:$0xf]
    %v133 = vld [vmem:[#allocation5 + $0x4c] sm:$0xf]
    %v134 = vld [vmem:[#allocation5 + $0x50] sm:$0xf]
    %v135 = vld [vmem:[#allocation5 + $0x54] sm:$0xf]
    %v136 = vld [vmem:[#allocation5 + $0x58] sm:$0xf]
    %v137 = vld [vmem:[#allocation5 + $0x5c] sm:$0xf]
    %v138 = vld [vmem:[#allocation5 + $0x60] sm:$0xf]
    %v139 = vld [vmem:[#allocation5 + $0x64] sm:$0xf]
    %v140 = vld [vmem:[#allocation5 + $0x68] sm:$0xf]
    %v141 = vld [vmem:[#allocation5 + $0x6c] sm:$0xf]
    %v142 = vld [vmem:[#allocation5 + $0x70] sm:$0xf]
    %v143 = vld [vmem:[#allocation5 + $0x74] sm:$0xf]
    %v144 = vld [vmem:[#allocation5 + $0x78] sm:$0xf]
    %v145 = vld [vmem:[#allocation5 + $0x7c] sm:$0xf]
    %v146 = vld [vmem:[#allocation5 + $0x80] sm:$0xf]
    %v147 = vld [vmem:[#allocation5 + $0x84] sm:$0xf]
    %v148 = vld [vmem:[#allocation5 + $0x88] sm:$0xf]
    %v149 = vld [vmem:[#allocation5 + $0x8c] sm:$0xf]
    %v150 = vld [vmem:[#allocation5 + $0x90] sm:$0xf]
    %v151 = vld [vmem:[#allocation5 + $0x94] sm:$0xf]
    %v152 = vld [vmem:[#allocation5 + $0x98] sm:$0xf]
    %v153 = vld [vmem:[#allocation5 + $0x9c] sm:$0xf]
    %v154 = vld [vmem:[#allocation5 + $0xa0] sm:$0xf]
    %v155 = vld [vmem:[#allocation5 + $0xa4] sm:$0xf]
    %v156 = vld [vmem:[#allocation5 + $0xa8] sm:$0xf]
    %v157 = vld [vmem:[#allocation5 + $0xac] sm:$0xf]
    %v158 = vld [vmem:[#allocation5 + $0xb0] sm:$0xf]
    %v159 = vld [vmem:[#allocation5 + $0xb4] sm:$0xf]
    %v160 = vld [vmem:[#allocation5 + $0xb8] sm:$0xf]
    %v161 = vld [vmem:[#allocation5 + $0xbc] sm:$0xf]
    %v162 = vld [vmem:[#allocation5 + $0xc0] sm:$0xf]
    %v163 = vld [vmem:[#allocation5 + $0xc4] sm:$0xf]
    %v164 = vld [vmem:[#allocation5 + $0xc8] sm:$0xf]
    %v165 = vld [vmem:[#allocation5 + $0xcc] sm:$0xf]
    %v166 = vld [vmem:[#allocation5 + $0xd0] sm:$0xf]
    %v167 = vld [vmem:[#allocation5 + $0xd4] sm:$0xf]
    %v168 = vld [vmem:[#allocation5 + $0xd8] sm:$0xf]
    %v169 = vld [vmem:[#allocation5 + $0xdc] sm:$0xf]
    %v170 = vld [vmem:[#allocation5 + $0xe0] sm:$0xf]
    %v171 = vld [vmem:[#allocation5 + $0xe4] sm:$0xf]
    %v172 = vld [vmem:[#allocation5 + $0xe8] sm:$0xf]
    %v173 = vld [vmem:[#allocation5 + $0xec] sm:$0xf]
    %v174 = vld [vmem:[#allocation5 + $0xf0] sm:$0xf]
    %v175 = vld [vmem:[#allocation5 + $0xf4] sm:$0xf]
    %v176 = vld [vmem:[#allocation5 + $0xf8] sm:$0xf]
    %v177 = vld [vmem:[#allocation5 + $0xfc] sm:$0xf]
    %v178 = vld [vmem:[#allocation5 + $0x100] sm:$0xf]
    %v179 = vld [vmem:[#allocation5 + $0x104] sm:$0xf]
    %v180 = vld [vmem:[#allocation5 + $0x108] sm:$0xf]
    %v181 = vld [vmem:[#allocation5 + $0x10c] sm:$0xf]
    %v182 = vld [vmem:[#allocation5 + $0x110] sm:$0xf]
    %v183 = vld [vmem:[#allocation5 + $0x114] sm:$0xf]
    %v184 = vld [vmem:[#allocation5 + $0x118] sm:$0xf]
    %v185 = vld [vmem:[#allocation5 + $0x11c] sm:$0xf]
    %v186 = vld [vmem:[#allocation5 + $0x120] sm:$0xf]
    %v187 = vld [vmem:[#allocation5 + $0x124] sm:$0xf]
    %v188 = vld [vmem:[#allocation5 + $0x128] sm:$0xf]
    %v189 = vld [vmem:[#allocation5 + $0x12c] sm:$0xf]
    %v190 = vld [vmem:[#allocation5 + $0x130] sm:$0xf]
    %v191 = vld [vmem:[#allocation5 + $0x134] sm:$0xf]
    %v192 = vld [vmem:[#allocation5 + $0x138] sm:$0xf]
    %v193 = vld [vmem:[#allocation5 + $0x13c] sm:$0xf]
    %v194 = vld [vmem:[#allocation5 + $0x140] sm:$0xf]
    %v195 = vld [vmem:[#allocation5 + $0x144] sm:$0xf]
    %v196 = vld [vmem:[#allocation5 + $0x148] sm:$0xf]
    %v197 = vld [vmem:[#allocation5 + $0x14c] sm:$0xf]
    %v198 = vld [vmem:[#allocation5 + $0x150] sm:$0xf]
    %v199 = vld [vmem:[#allocation5 + $0x154] sm:$0xf]
    %v200 = vld [vmem:[#allocation5 + $0x158] sm:$0xf]
    %v201 = vld [vmem:[#allocation5 + $0x15c] sm:$0xf]
    %v202 = vld [vmem:[#allocation5 + $0x160] sm:$0xf]
    %v203 = vld [vmem:[#allocation5 + $0x164] sm:$0xf]
    %v204 = vld [vmem:[#allocation5 + $0x168] sm:$0xf]
    %v205 = vld [vmem:[#allocation5 + $0x16c] sm:$0xf]
    %v206 = vld [vmem:[#allocation5 + $0x170] sm:$0xf]
    %v207 = vld [vmem:[#allocation5 + $0x174] sm:$0xf]
    %v208 = vld [vmem:[#allocation5 + $0x178] sm:$0xf]
    %v209 = vld [vmem:[#allocation5 + $0x17c] sm:$0xf]
    %v210 = vld [vmem:[#allocation5 + $0x180] sm:$0xf]
    %v211 = vld [vmem:[#allocation5 + $0x184] sm:$0xf]
    %v212 = vld [vmem:[#allocation5 + $0x188] sm:$0xf]
    %v213 = vld [vmem:[#allocation5 + $0x18c] sm:$0xf]
    %v214 = vld [vmem:[#allocation5 + $0x190] sm:$0xf]
    %v215 = vld [vmem:[#allocation5 + $0x194] sm:$0xf]
    %v216 = vld [vmem:[#allocation5 + $0x198] sm:$0xf]
    %v217 = vld [vmem:[#allocation5 + $0x19c] sm:$0xf]
    %v218 = vld [vmem:[#allocation5 + $0x1a0] sm:$0xf]
    %v219 = vld [vmem:[#allocation5 + $0x1a4] sm:$0xf]
    %v220 = vld [vmem:[#allocation5 + $0x1a8] sm:$0xf]
    %v221 = vld [vmem:[#allocation5 + $0x1ac] sm:$0xf]
    %v222 = vld [vmem:[#allocation5 + $0x1b0] sm:$0xf]
    %v223 = vld [vmem:[#allocation5 + $0x1b4] sm:$0xf]
    %v224 = vld [vmem:[#allocation5 + $0x1b8] sm:$0xf]
    %v225 = vld [vmem:[#allocation5 + $0x1bc] sm:$0xf]
    %v226 = vld [vmem:[#allocation5 + $0x1c0] sm:$0xf]
    %v227 = vld [vmem:[#allocation5 + $0x1c4] sm:$0xf]
    %v228 = vld [vmem:[#allocation5 + $0x1c8] sm:$0xf]
    %v229 = vld [vmem:[#allocation5 + $0x1cc] sm:$0xf]
    %v230 = vld [vmem:[#allocation5 + $0x1d0] sm:$0xf]
    %v231 = vld [vmem:[#allocation5 + $0x1d4] sm:$0xf]
    %v232 = vld [vmem:[#allocation5 + $0x1d8] sm:$0xf]
    %v233 = vld [vmem:[#allocation5 + $0x1dc] sm:$0xf]
    %v234 = vld [vmem:[#allocation5 + $0x1e0] sm:$0xf]
    %v235 = vld [vmem:[#allocation5 + $0x1e4] sm:$0xf]
    %v236 = vld [vmem:[#allocation5 + $0x1e8] sm:$0xf]
    %v237 = vld [vmem:[#allocation5 + $0x1ec] sm:$0xf]
    %v238 = vld [vmem:[#allocation5 + $0x1f0] sm:$0xf]
    %v239 = vld [vmem:[#allocation5 + $0x1f4] sm:$0xf]
    %v240 = vld [vmem:[#allocation5 + $0x1f8] sm:$0xf]
    %v241 = vld [vmem:[#allocation5 + $0x1fc] sm:$0xf]
    %v242 = vld [vmem:[%s2] sm:$0x1]
    %v244 = vperm.slane %v242, 0
    %v374 = vunpack.c.l.b16 %v114
    %v375 = vunpack.c.l.b16 %v115
    %v376 = vunpack.c.l.b16 %v116
    %v377 = vunpack.c.l.b16 %v117
    %v378 = vunpack.c.l.b16 %v118
    %v379 = vunpack.c.l.b16 %v119
    %v380 = vunpack.c.l.b16 %v120
    %v381 = vunpack.c.l.b16 %v121
    %v382 = vunpack.c.l.b16 %v122
    %v383 = vunpack.c.l.b16 %v123
    %v384 = vunpack.c.l.b16 %v124
    %v385 = vunpack.c.l.b16 %v125
    %v386 = vunpack.c.l.b16 %v126
    %v387 = vunpack.c.l.b16 %v127
    %v388 = vunpack.c.l.b16 %v128
    %v389 = vunpack.c.l.b16 %v129
    %v390 = vunpack.c.l.b16 %v130
    %v391 = vunpack.c.l.b16 %v131
    %v392 = vunpack.c.l.b16 %v132
    %v393 = vunpack.c.l.b16 %v133
    %v394 = vunpack.c.l.b16 %v134
    %v395 = vunpack.c.l.b16 %v135
    %v396 = vunpack.c.l.b16 %v136
    %v397 = vunpack.c.l.b16 %v137
    %v398 = vunpack.c.l.b16 %v138
    %v399 = vunpack.c.l.b16 %v139
    %v400 = vunpack.c.l.b16 %v140
    %v401 = vunpack.c.l.b16 %v141
    %v402 = vunpack.c.l.b16 %v142
    %v403 = vunpack.c.l.b16 %v143
    %v404 = vunpack.c.l.b16 %v144
    %v405 = vunpack.c.l.b16 %v145
    %v406 = vunpack.c.l.b16 %v146
    %v407 = vunpack.c.l.b16 %v147
    %v408 = vunpack.c.l.b16 %v148
    %v409 = vunpack.c.l.b16 %v149
    %v410 = vunpack.c.l.b16 %v150
    %v411 = vunpack.c.l.b16 %v151
    %v412 = vunpack.c.l.b16 %v152
    %v413 = vunpack.c.l.b16 %v153
    %v414 = vunpack.c.l.b16 %v154
    %v415 = vunpack.c.l.b16 %v155
    %v416 = vunpack.c.l.b16 %v156
    %v417 = vunpack.c.l.b16 %v157
    %v418 = vunpack.c.l.b16 %v158
    %v419 = vunpack.c.l.b16 %v159
    %v420 = vunpack.c.l.b16 %v160
    %v421 = vunpack.c.l.b16 %v161
    %v422 = vunpack.c.l.b16 %v162
    %v423 = vunpack.c.l.b16 %v163
    %v424 = vunpack.c.l.b16 %v164
    %v425 = vunpack.c.l.b16 %v165
    %v426 = vunpack.c.l.b16 %v166
    %v427 = vunpack.c.l.b16 %v167
    %v428 = vunpack.c.l.b16 %v168
    %v429 = vunpack.c.l.b16 %v169
    %v430 = vunpack.c.l.b16 %v170
    %v431 = vunpack.c.l.b16 %v171
    %v432 = vunpack.c.l.b16 %v172
    %v433 = vunpack.c.l.b16 %v173
    %v434 = vunpack.c.l.b16 %v174
    %v435 = vunpack.c.l.b16 %v175
    %v436 = vunpack.c.l.b16 %v176
    %v437 = vunpack.c.l.b16 %v177
    %v438 = vunpack.c.l.b16 %v178
    %v439 = vunpack.c.l.b16 %v179
    %v440 = vunpack.c.l.b16 %v180
    %v441 = vunpack.c.l.b16 %v181
    %v442 = vunpack.c.l.b16 %v182
    %v443 = vunpack.c.l.b16 %v183
    %v444 = vunpack.c.l.b16 %v184
    %v445 = vunpack.c.l.b16 %v185
    %v446 = vunpack.c.l.b16 %v186
    %v447 = vunpack.c.l.b16 %v187
    %v448 = vunpack.c.l.b16 %v188
    %v449 = vunpack.c.l.b16 %v189
    %v450 = vunpack.c.l.b16 %v190
    %v451 = vunpack.c.l.b16 %v191
    %v452 = vunpack.c.l.b16 %v192
    %v453 = vunpack.c.l.b16 %v193
    %v454 = vunpack.c.l.b16 %v194
    %v455 = vunpack.c.l.b16 %v195
    %v456 = vunpack.c.l.b16 %v196
    %v457 = vunpack.c.l.b16 %v197
    %v458 = vunpack.c.l.b16 %v198
    %v459 = vunpack.c.l.b16 %v199
    %v460 = vunpack.c.l.b16 %v200
    %v461 = vunpack.c.l.b16 %v201
    %v462 = vunpack.c.l.b16 %v202
    %v463 = vunpack.c.l.b16 %v203
    %v464 = vunpack.c.l.b16 %v204
    %v465 = vunpack.c.l.b16 %v205
    %v466 = vunpack.c.l.b16 %v206
    %v467 = vunpack.c.l.b16 %v207
    %v468 = vunpack.c.l.b16 %v208
    %v469 = vunpack.c.l.b16 %v209
    %v470 = vunpack.c.l.b16 %v210
    %v471 = vunpack.c.l.b16 %v211
    %v472 = vunpack.c.l.b16 %v212
    %v473 = vunpack.c.l.b16 %v213
    %v474 = vunpack.c.l.b16 %v214
    %v475 = vunpack.c.l.b16 %v215
    %v476 = vunpack.c.l.b16 %v216
    %v477 = vunpack.c.l.b16 %v217
    %v478 = vunpack.c.l.b16 %v218
    %v479 = vunpack.c.l.b16 %v219
    %v480 = vunpack.c.l.b16 %v220
    %v481 = vunpack.c.l.b16 %v221
    %v482 = vunpack.c.l.b16 %v222
    %v483 = vunpack.c.l.b16 %v223
    %v484 = vunpack.c.l.b16 %v224
    %v485 = vunpack.c.l.b16 %v225
    %v486 = vunpack.c.l.b16 %v226
    %v487 = vunpack.c.l.b16 %v227
    %v488 = vunpack.c.l.b16 %v228
    %v489 = vunpack.c.l.b16 %v229
    %v490 = vunpack.c.l.b16 %v230
    %v491 = vunpack.c.l.b16 %v231
    %v492 = vunpack.c.l.b16 %v232
    %v493 = vunpack.c.l.b16 %v233
    %v494 = vunpack.c.l.b16 %v234
    %v495 = vunpack.c.l.b16 %v235
    %v496 = vunpack.c.l.b16 %v236
    %v497 = vunpack.c.l.b16 %v237
    %v498 = vunpack.c.l.b16 %v238
    %v499 = vunpack.c.l.b16 %v239
    %v500 = vunpack.c.l.b16 %v240
    %v501 = vunpack.c.l.b16 %v241
    %v502 = vpack.c.b16 %v375, %v374
    %v503 = vpack.c.b16 %v377, %v376
    %v504 = vpack.c.b16 %v379, %v378
    %v505 = vpack.c.b16 %v381, %v380
    %v506 = vpack.c.b16 %v383, %v382
    %v507 = vpack.c.b16 %v385, %v384
    %v508 = vpack.c.b16 %v387, %v386
    %v509 = vpack.c.b16 %v389, %v388
    %v510 = vpack.c.b16 %v391, %v390
    %v511 = vpack.c.b16 %v393, %v392
    %v512 = vpack.c.b16 %v395, %v394
    %v513 = vpack.c.b16 %v397, %v396
    %v514 = vpack.c.b16 %v399, %v398
    %v515 = vpack.c.b16 %v401, %v400
    %v516 = vpack.c.b16 %v403, %v402
    %v517 = vpack.c.b16 %v405, %v404
    %v518 = vpack.c.b16 %v407, %v406
    %v519 = vpack.c.b16 %v409, %v408
    %v520 = vpack.c.b16 %v411, %v410
    %v521 = vpack.c.b16 %v413, %v412
    %v522 = vpack.c.b16 %v415, %v414
    %v523 = vpack.c.b16 %v417, %v416
    %v524 = vpack.c.b16 %v419, %v418
    %v525 = vpack.c.b16 %v421, %v420
    %v526 = vpack.c.b16 %v423, %v422
    %v527 = vpack.c.b16 %v425, %v424
    %v528 = vpack.c.b16 %v427, %v426
    %v529 = vpack.c.b16 %v429, %v428
    %v530 = vpack.c.b16 %v431, %v430
    %v531 = vpack.c.b16 %v433, %v432
    %v532 = vpack.c.b16 %v435, %v434
    %v533 = vpack.c.b16 %v437, %v436
    %v534 = vpack.c.b16 %v439, %v438
    %v535 = vpack.c.b16 %v441, %v440
    %v536 = vpack.c.b16 %v443, %v442
    %v537 = vpack.c.b16 %v445, %v444
    %v538 = vpack.c.b16 %v447, %v446
    %v539 = vpack.c.b16 %v449, %v448
    %v540 = vpack.c.b16 %v451, %v450
    %v541 = vpack.c.b16 %v453, %v452
    %v542 = vpack.c.b16 %v455, %v454
    %v543 = vpack.c.b16 %v457, %v456
    %v544 = vpack.c.b16 %v459, %v458
    %v545 = vpack.c.b16 %v461, %v460
    %v546 = vpack.c.b16 %v463, %v462
    %v547 = vpack.c.b16 %v465, %v464
    %v548 = vpack.c.b16 %v467, %v466
    %v549 = vpack.c.b16 %v469, %v468
    %v550 = vpack.c.b16 %v471, %v470
    %v551 = vpack.c.b16 %v473, %v472
    %v552 = vpack.c.b16 %v475, %v474
    %v553 = vpack.c.b16 %v477, %v476
    %v554 = vpack.c.b16 %v479, %v478
    %v555 = vpack.c.b16 %v481, %v480
    %v556 = vpack.c.b16 %v483, %v482
    %v557 = vpack.c.b16 %v485, %v484
    %v558 = vpack.c.b16 %v487, %v486
    %v559 = vpack.c.b16 %v489, %v488
    %v560 = vpack.c.b16 %v491, %v490
    %v561 = vpack.c.b16 %v493, %v492
    %v562 = vpack.c.b16 %v495, %v494
    %v563 = vpack.c.b16 %v497, %v496
    %v564 = vpack.c.b16 %v499, %v498
    %v565 = vpack.c.b16 %v501, %v500
    %630 = vmatpush.bf16.msra.mxu0 %v509
    %631 = vmatpush.bf16.msra.mxu0 %v508
    %632 = vmatpush.bf16.msra.mxu0 %v507
    %633 = vmatpush.bf16.msra.mxu0 %v506
    %634 = vmatpush.bf16.msra.mxu0 %v505
    %635 = vmatpush.bf16.msra.mxu0 %v504
    %636 = vmatpush.bf16.msra.mxu0 %v503
    %637 = vmatpush.bf16.msra.mxu0 %v502
    %638 = vmatmul.bf16.gmra.mxu0 %v106
    %v639 = vpop.f32.mrf.mxu0
    %v640 = vadd.f32 %v244, %v639
    %v641 = vpop.f32.mrf.mxu0
    %v642 = vadd.f32 %v244, %v641
    %643 = vdwg.mxu0
    %644 = vmatpush.bf16.msra.mxu0 %v517
    %645 = vmatpush.bf16.msra.mxu0 %v516
    %646 = vmatpush.bf16.msra.mxu0 %v515
    %647 = vmatpush.bf16.msra.mxu0 %v514
    %648 = vmatpush.bf16.msra.mxu0 %v513
    %649 = vmatpush.bf16.msra.mxu0 %v512
    %650 = vmatpush.bf16.msra.mxu0 %v511
    %651 = vmatpush.bf16.msra.mxu0 %v510
    %652 = vmatmul.bf16.gmra.mxu0 %v107
    %v653 = vpop.f32.mrf.mxu0
    %v654 = vadd.f32 %v640, %v653
    %v655 = vpop.f32.mrf.mxu0
    %v656 = vadd.f32 %v642, %v655
    %657 = vdwg.mxu0
    %658 = vmatpush.bf16.msra.mxu0 %v525
    %659 = vmatpush.bf16.msra.mxu0 %v524
    %660 = vmatpush.bf16.msra.mxu0 %v523
    %661 = vmatpush.bf16.msra.mxu0 %v522
    %662 = vmatpush.bf16.msra.mxu0 %v521
    %663 = vmatpush.bf16.msra.mxu0 %v520
    %664 = vmatpush.bf16.msra.mxu0 %v519
    %665 = vmatpush.bf16.msra.mxu0 %v518
    %666 = vmatmul.bf16.gmra.mxu0 %v108
    %v667 = vpop.f32.mrf.mxu0
    %v668 = vadd.f32 %v654, %v667
    %v669 = vpop.f32.mrf.mxu0
    %v670 = vadd.f32 %v656, %v669
    %671 = vdwg.mxu0
    %672 = vmatpush.bf16.msra.mxu0 %v533
    %673 = vmatpush.bf16.msra.mxu0 %v532
    %674 = vmatpush.bf16.msra.mxu0 %v531
    %675 = vmatpush.bf16.msra.mxu0 %v530
    %676 = vmatpush.bf16.msra.mxu0 %v529
    %677 = vmatpush.bf16.msra.mxu0 %v528
    %678 = vmatpush.bf16.msra.mxu0 %v527
    %679 = vmatpush.bf16.msra.mxu0 %v526
    %680 = vmatmul.bf16.gmra.mxu0 %v109
    %v681 = vpop.f32.mrf.mxu0
    %v682 = vadd.f32 %v668, %v681
    %v683 = vpop.f32.mrf.mxu0
    %v684 = vadd.f32 %v670, %v683
    %685 = vdwg.mxu0
    %686 = vmatpush.bf16.msra.mxu0 %v541
    %687 = vmatpush.bf16.msra.mxu0 %v540
    %688 = vmatpush.bf16.msra.mxu0 %v539
    %689 = vmatpush.bf16.msra.mxu0 %v538
    %690 = vmatpush.bf16.msra.mxu0 %v537
    %691 = vmatpush.bf16.msra.mxu0 %v536
    %692 = vmatpush.bf16.msra.mxu0 %v535
    %693 = vmatpush.bf16.msra.mxu0 %v534
    %694 = vmatmul.bf16.gmra.mxu0 %v110
    %v695 = vpop.f32.mrf.mxu0
    %v696 = vadd.f32 %v682, %v695
    %v697 = vpop.f32.mrf.mxu0
    %v698 = vadd.f32 %v684, %v697
    %699 = vdwg.mxu0
    %700 = vmatpush.bf16.msra.mxu0 %v549
    %701 = vmatpush.bf16.msra.mxu0 %v548
    %702 = vmatpush.bf16.msra.mxu0 %v547
    %703 = vmatpush.bf16.msra.mxu0 %v546
    %704 = vmatpush.bf16.msra.mxu0 %v545
    %705 = vmatpush.bf16.msra.mxu0 %v544
    %706 = vmatpush.bf16.msra.mxu0 %v543
    %707 = vmatpush.bf16.msra.mxu0 %v542
    %708 = vmatmul.bf16.gmra.mxu0 %v111
    %v709 = vpop.f32.mrf.mxu0
    %v710 = vadd.f32 %v696, %v709
    %v711 = vpop.f32.mrf.mxu0
    %v712 = vadd.f32 %v698, %v711
    %713 = vdwg.mxu0
    %714 = vmatpush.bf16.msra.mxu0 %v557
    %715 = vmatpush.bf16.msra.mxu0 %v556
    %716 = vmatpush.bf16.msra.mxu0 %v555
    %717 = vmatpush.bf16.msra.mxu0 %v554
    %718 = vmatpush.bf16.msra.mxu0 %v553
    %719 = vmatpush.bf16.msra.mxu0 %v552
    %720 = vmatpush.bf16.msra.mxu0 %v551
    %721 = vmatpush.bf16.msra.mxu0 %v550
    %722 = vmatmul.bf16.gmra.mxu0 %v112
    %v723 = vpop.f32.mrf.mxu0
    %v724 = vadd.f32 %v710, %v723
    %v725 = vpop.f32.mrf.mxu0
    %v726 = vadd.f32 %v712, %v725
    %727 = vdwg.mxu0
    %728 = vmatpush.bf16.msra.mxu0 %v565
    %729 = vmatpush.bf16.msra.mxu0 %v564
    %730 = vmatpush.bf16.msra.mxu0 %v563
    %731 = vmatpush.bf16.msra.mxu0 %v562
    %732 = vmatpush.bf16.msra.mxu0 %v561
    %733 = vmatpush.bf16.msra.mxu0 %v560
    %734 = vmatpush.bf16.msra.mxu0 %v559
    %735 = vmatpush.bf16.msra.mxu0 %v558
    %736 = vmatmul.bf16.gmra.mxu0 %v113
    %v737 = vpop.f32.mrf.mxu0
    %v738 = vadd.f32 %v724, %v737
    %v739 = vpop.f32.mrf.mxu0
    %v740 = vadd.f32 %v726, %v739
    %741 = vdwg.mxu0
    %v742 = vmax.f32 %v738, 0.0
    %v743 = vmax.f32 %v740, 0.0
    %v744 = vpack.c.bf16 %v743, %v742
    %v745 = vld [vmem:[#allocation7] sm:$0xf]
    %v746 = vld [vmem:[#allocation7 + $0x4] sm:$0xf]
    %v747 = vld [vmem:[#allocation7 + $0x8] sm:$0xf]
    %v748 = vld [vmem:[#allocation7 + $0xc] sm:$0xf]
    %v749 = vld [vmem:[#allocation7 + $0x10] sm:$0xf]
    %v750 = vld [vmem:[#allocation7 + $0x14] sm:$0xf]
    %v751 = vld [vmem:[#allocation7 + $0x18] sm:$0xf]
    %v752 = vld [vmem:[#allocation7 + $0x1c] sm:$0xf]
    %v753 = vld [vmem:[#allocation7 + $0x20] sm:$0xf]
    %v754 = vld [vmem:[#allocation7 + $0x24] sm:$0xf]
    %v755 = vld [vmem:[#allocation7 + $0x28] sm:$0xf]
    %v756 = vld [vmem:[#allocation7 + $0x2c] sm:$0xf]
    %v757 = vld [vmem:[#allocation7 + $0x30] sm:$0xf]
    %v758 = vld [vmem:[#allocation7 + $0x34] sm:$0xf]
    %v759 = vld [vmem:[#allocation7 + $0x38] sm:$0xf]
    %v760 = vld [vmem:[#allocation7 + $0x3c] sm:$0xf]
    %v761 = vld [vmem:[%s4] sm:$0x1]
    %v763 = vperm.slane %v761, 0
    %v781 = vunpack.c.l.b16 %v745
    %v782 = vunpack.c.l.b16 %v746
    %v783 = vunpack.c.l.b16 %v747
    %v784 = vunpack.c.l.b16 %v748
    %v785 = vunpack.c.l.b16 %v749
    %v786 = vunpack.c.l.b16 %v750
    %v787 = vunpack.c.l.b16 %v751
    %v788 = vunpack.c.l.b16 %v752
    %v789 = vunpack.c.l.b16 %v753
    %v790 = vunpack.c.l.b16 %v754
    %v791 = vunpack.c.l.b16 %v755
    %v792 = vunpack.c.l.b16 %v756
    %v793 = vunpack.c.l.b16 %v757
    %v794 = vunpack.c.l.b16 %v758
    %v795 = vunpack.c.l.b16 %v759
    %v796 = vunpack.c.l.b16 %v760
    %v797 = vpack.c.b16 %v782, %v781
    %v798 = vpack.c.b16 %v784, %v783
    %v799 = vpack.c.b16 %v786, %v785
    %v800 = vpack.c.b16 %v788, %v787
    %v801 = vpack.c.b16 %v790, %v789
    %v802 = vpack.c.b16 %v792, %v791
    %v803 = vpack.c.b16 %v794, %v793
    %v804 = vpack.c.b16 %v796, %v795
    %813 = vmatpush.bf16.msra.mxu0 %v804
    %814 = vmatpush.bf16.msra.mxu0 %v803
    %815 = vmatpush.bf16.msra.mxu0 %v802
    %816 = vmatpush.bf16.msra.mxu0 %v801
    %817 = vmatpush.bf16.msra.mxu0 %v800
    %818 = vmatpush.bf16.msra.mxu0 %v799
    %819 = vmatpush.bf16.msra.mxu0 %v798
    %820 = vmatpush.bf16.msra.mxu0 %v797
    %821 = vmatmul.bf16.gmra.mxu0 %v744
    %v822 = vpop.f32.mrf.mxu0
    %v823 = vadd.f32 %v763, %v822
    %v824 = vpop.f32.mrf.mxu0
    %v825 = vadd.f32 %v763, %v824
    %826 = vdwg.mxu0
    %v827 = vmax.f32 %v823, 0.0
    %v828 = vmax.f32 %v825, 0.0
    %v829 = vpack.c.bf16 %v828, %v827
    %v830 = vld [vmem:[#allocation8] sm:$0xf]
    %v831 = vld [vmem:[#allocation8 + $0x4] sm:$0xf]
    %v832 = vld [vmem:[#allocation8 + $0x8] sm:$0xf]
    %v833 = vld [vmem:[#allocation8 + $0xc] sm:$0xf]
    %v834 = vld [vmem:[#allocation8 + $0x10] sm:$0xf]
    %v835 = vld [vmem:[#allocation8 + $0x14] sm:$0xf]
    %v836 = vld [vmem:[#allocation8 + $0x18] sm:$0xf]
    %v837 = vld [vmem:[#allocation8 + $0x1c] sm:$0xf]
    %v838 = vld [vmem:[#allocation8 + $0x20] sm:$0xf]
    %v839 = vld [vmem:[#allocation8 + $0x24] sm:$0xf]
    %v840 = vld [vmem:[#allocation8 + $0x28] sm:$0xf]
    %v841 = vld [vmem:[#allocation8 + $0x2c] sm:$0xf]
    %v842 = vld [vmem:[#allocation8 + $0x30] sm:$0xf]
    %v843 = vld [vmem:[#allocation8 + $0x34] sm:$0xf]
    %v844 = vld [vmem:[#allocation8 + $0x38] sm:$0xf]
    %v845 = vld [vmem:[#allocation8 + $0x3c] sm:$0xf]
    %v846 = vld [vmem:[%s6] sm:$0x1]
    %v848 = vperm.slane %v846, 0
    %v866 = vunpack.c.l.b16 %v830
    %v867 = vunpack.c.l.b16 %v831
    %v868 = vunpack.c.l.b16 %v832
    %v869 = vunpack.c.l.b16 %v833
    %v870 = vunpack.c.l.b16 %v834
    %v871 = vunpack.c.l.b16 %v835
    %v872 = vunpack.c.l.b16 %v836
    %v873 = vunpack.c.l.b16 %v837
    %v874 = vunpack.c.l.b16 %v838
    %v875 = vunpack.c.l.b16 %v839
    %v876 = vunpack.c.l.b16 %v840
    %v877 = vunpack.c.l.b16 %v841
    %v878 = vunpack.c.l.b16 %v842
    %v879 = vunpack.c.l.b16 %v843
    %v880 = vunpack.c.l.b16 %v844
    %v881 = vunpack.c.l.b16 %v845
    %v882 = vpack.c.b16 %v867, %v866
    %v883 = vpack.c.b16 %v869, %v868
    %v884 = vpack.c.b16 %v871, %v870
    %v885 = vpack.c.b16 %v873, %v872
    %v886 = vpack.c.b16 %v875, %v874
    %v887 = vpack.c.b16 %v877, %v876
    %v888 = vpack.c.b16 %v879, %v878
    %v889 = vpack.c.b16 %v881, %v880
    %898 = vmatpush.bf16.msra.mxu0 %v889
    %899 = vmatpush.bf16.msra.mxu0 %v888
    %900 = vmatpush.bf16.msra.mxu0 %v887
    %901 = vmatpush.bf16.msra.mxu0 %v886
    %902 = vmatpush.bf16.msra.mxu0 %v885
    %903 = vmatpush.bf16.msra.mxu0 %v884
    %904 = vmatpush.bf16.msra.mxu0 %v883
    %905 = vmatpush.bf16.msra.mxu0 %v882
    %906 = vmatmul.bf16.gmra.mxu0 %v829
    %v907 = vpop.f32.mrf.mxu0
    %v908 = vadd.f32 %v848, %v907
    %v909 = vpop.f32.mrf.mxu0
    %v910 = vadd.f32 %v848, %v909
    %911 = vdwg.mxu0
    %912 = vmax.xlane.f32.xlu0 %v908
    %v913 = vpop.xlane.xlu0 %912
    %914 = vmax.xlane.f32.xlu0 %v910
    %v915 = vpop.xlane.xlu0 %914
    %v916 = vsub.f32 %v908, %v913
    %v917 = vsub.f32 %v910, %v915
    %v918 = vmul.f32 %v916, 1.442695
    %v919 = vpow.pop %v918
    %v920 = vmul.f32 %v917, 1.442695
    %v921 = vpow.pop %v920
    %922 = vadd.xlane.f32.xlu0 %v919
    %v923 = vpop.xlane.xlu0 %922
    %924 = vadd.xlane.f32.xlu0 %v921
    %v925 = vpop.xlane.xlu0 %924
    %v926 = vlog2.pop %v923
    %v927 = vmul.f32 %v926, 0.6931472
    %v928 = vlog2.pop %v925
    %v929 = vmul.f32 %v928, 0.6931472
    %v930 = vsub.f32 %v916, %v927
    %v931 = vsub.f32 %v917, %v929
    %932 = vst [vmem:[#allocation10] sm:$0xff] %v930
    %933 = vst [vmem:[#allocation10 + $0x8] sm:$0xff] %v931
    // Predicated region
    $region46: #{tpu_custom_call.1} parent=1 // pred_check
      _
    $region47: #{tpu_custom_call.1} parent=1 // pred_check_branch
      %935 = sbr.rel (0) target = $region49
    $region48: #{tpu_custom_call.1} parent=1 // pred_region
      %937 = vsyncadd [#allocation4], 0
      %s938 = sshll.u32 [#allocation10], 4
      %s939 = int_to_ptr.vmem [resolvable:$true] %s938
      %s940 = sshll.u32 %s7, 4
      %s941 = int_to_ptr.hbm [resolvable:$true] %s940
      %946 = dma.vmem_to_hbm [thread:$0]  %s939, 256, %s941, [#allocation4], 128, 128, 8
    $region49: #{tpu_custom_call.1} parent=1 // pred_fallthru
      _
    // Predicated region
    $region50: #{tpu_custom_call.1} parent=1 // pred_check
      _
    $region51: #{tpu_custom_call.1} parent=1 // pred_check_branch
      %948 = sbr.rel (0) target = $region53
    $region52: #{tpu_custom_call.1} parent=1 // pred_region
      %950 = dma.done [#allocation4], 256
    $region53: #{tpu_custom_call.1} parent=1 // pred_fallthru
      _
    %951 = vsyncpa [#allocation3], 1
    %952 = vsyncpa [#allocation6], 1
    %953 = vsyncpa [#allocation9], 1
    %954 = vsyncpa [#allocation4], 1

// kernel: tpu_custom_call.1
$region0: #{tpu_custom_call.1}
  #allocation0 [shape = 'u32[]', space=smem, size = 0x4, offset = 0x4, fixed_abs, tag = 'smem constant byte address 0x4 - core index']
  #allocation1 [shape = 'u32[72,128]{1,0:T(1,128)}', space=vmem, size = 0x9000, scoped, tag = 'internal scratch']
  %s0 = inlined_call_operand.hbm [shape: f32[16,1024], index: 0, kind: input, shape index: {}]
  %s1 = inlined_call_operand.hbm [shape: bf16[1024,128], index: 1, kind: input, shape index: {}]
  %s2 = inlined_call_operand.vmem [shape: f32[1,128], index: 2, kind: input, shape index: {}]
  %s3 = inlined_call_operand.hbm [shape: bf16[128,128], index: 3, kind: input, shape index: {}]
  %s4 = inlined_call_operand.vmem [shape: f32[1,128], index: 4, kind: input, shape index: {}]
  %s5 = inlined_call_operand.hbm [shape: bf16[128,128], index: 5, kind: input, shape index: {}]
  %s6 = inlined_call_operand.vmem [shape: f32[1,128], index: 6, kind: input, shape index: {}]
  %s7 = inlined_call_operand.hbm [shape: f32[16,128], index: 7, kind: output, shape index: {}]
  %s8 = sld [smem:[#allocation0]]
  $region54: #{tpu_custom_call.1} parent=0
    _
  %s10 = ssub.s32 1, %s8
  %s11 = scalar_select 0, %s10, %s8
  $region1: #{tpu_custom_call.1} parent=0
    #allocation2 [shape = 'u8[65536]{0}', space=vmem, size = 0x10000, scoped, tag = 'input window, operand 0, single buffered']
    #allocation3 [shape = 's32[1]{0}', space=sflag, size = 0x4, scoped, tag = 'scoped memory for tpu_custom_call.1']
    #allocation4 [shape = 's32[1]{0}', space=sflag, size = 0x4, scoped, tag = 'scoped memory for tpu_custom_call.1']
    #allocation5 [shape = 'u8[262144]{0}', space=vmem, size = 0x40000, scoped, tag = 'input window, operand 1, single buffered']
    #allocation6 [shape = 's32[1]{0}', space=sflag, size = 0x4, scoped, tag = 'scoped memory for tpu_custom_call.1']
    #allocation7 [shape = 'u8[32768]{0}', space=vmem, size = 0x8000, scoped, tag = 'input window, operand 3, single buffered']
    #allocation8 [shape = 'u8[32768]{0}', space=vmem, size = 0x8000, scoped, tag = 'input window, operand 5, single buffered']
    #allocation9 [shape = 's32[1]{0}', space=sflag, size = 0x4, scoped, tag = 'scoped memory for tpu_custom_call.1']
    #allocation10 [shape = 'u8[8192]{0}', space=vmem, size = 0x2000, scoped, tag = 'output window, operand 0, single buffered']
    %12 = vsyncpa [#allocation3], 0
    %13 = vsyncpa [#allocation6], 0
    %14 = vsyncpa [#allocation9], 0
    %15 = vsyncpa [#allocation4], 0
    // Predicated region
    $region2: #{tpu_custom_call.1} parent=1 // pred_check
      _
    $region3: #{tpu_custom_call.1} parent=1 // pred_check_branch
      %17 = sbr.rel (0) target = $region5
    $region4: #{tpu_custom_call.1} parent=1 // pred_region
      %19 = vsyncadd [#allocation3], 0
      %s20 = sshll.u32 %s0, 4
      %s21 = int_to_ptr.hbm [resolvable:$true] %s20
      %s22 = sshll.u32 [#allocation2], 4
      %s23 = int_to_ptr.vmem [resolvable:$true] %s22
      %28 = dma.hbm_to_vmem [thread:$0]  %s21, 2048, %s23, [#allocation3], 1024, 1024, 64
    $region5: #{tpu_custom_call.1} parent=1 // pred_fallthru
      _
    // Predicated region
    $region6: #{tpu_custom_call.1} parent=1 // pred_check
      _
    $region7: #{tpu_custom_call.1} parent=1 // pred_check_branch
      %30 = sbr.rel (0) target = $region9
    $region8: #{tpu_custom_call.1} parent=1 // pred_region
      %32 = vsyncadd [#allocation6], 0
      %s33 = sshll.u32 %s1, 4
      %s34 = int_to_ptr.hbm [resolvable:$true] %s33
      %s35 = sshll.u32 [#allocation5], 4
      %s36 = int_to_ptr.vmem [resolvable:$true] %s35
      %41 = dma.hbm_to_vmem [thread:$0]  %s34, 8192, %s36, [#allocation6], 64, 64, 4
    $region9: #{tpu_custom_call.1} parent=1 // pred_fallthru
      _
    // Predicated region
    $region10: #{tpu_custom_call.1} parent=1 // pred_check
      _
    $region11: #{tpu_custom_call.1} parent=1 // pred_check_branch
      %43 = sbr.rel (0) target = $region13
    $region12: #{tpu_custom_call.1} parent=1 // pred_region
      _
    $region13: #{tpu_custom_call.1} parent=1 // pred_fallthru
      _
    // Predicated region
    $region14: #{tpu_custom_call.1} parent=1 // pred_check
      _
    $region15: #{tpu_custom_call.1} parent=1 // pred_check_branch
      %45 = sbr.rel (0) target = $region17
    $region16: #{tpu_custom_call.1} parent=1 // pred_region
      %47 = vsyncadd [#allocation6], 0
      %s48 = sshll.u32 %s3, 4
      %s49 = int_to_ptr.hbm [resolvable:$true] %s48
      %s50 = sshll.u32 [#allocation7], 4
      %s51 = int_to_ptr.vmem [resolvable:$true] %s50
      %56 = dma.hbm_to_vmem [thread:$0]  %s49, 1024, %s51, [#allocation6], 64, 64, 4
    $region17: #{tpu_custom_call.1} parent=1 // pred_fallthru
      _
    // Predicated region
    $region18: #{tpu_custom_call.1} parent=1 // pred_check
      _
    $region19: #{tpu_custom_call.1} parent=1 // pred_check_branch
      %58 = sbr.rel (0) target = $region21
    $region20: #{tpu_custom_call.1} parent=1 // pred_region
      _
    $region21: #{tpu_custom_call.1} parent=1 // pred_fallthru
      _
    // Predicated region
    $region22: #{tpu_custom_call.1} parent=1 // pred_check
      _
    $region23: #{tpu_custom_call.1} parent=1 // pred_check_branch
      %60 = sbr.rel (0) target = $region25
    $region24: #{tpu_custom_call.1} parent=1 // pred_region
      %62 = vsyncadd [#allocation9], 0
      %s63 = sshll.u32 %s5, 4
      %s64 = int_to_ptr.hbm [resolvable:$true] %s63
      %s65 = sshll.u32 [#allocation8], 4
      %s66 = int_to_ptr.vmem [resolvable:$true] %s65
      %71 = dma.hbm_to_vmem [thread:$0]  %s64, 1024, %s66, [#allocation9], 64, 64, 4
    $region25: #{tpu_custom_call.1} parent=1 // pred_fallthru
      _
    // Predicated region
    $region26: #{tpu_custom_call.1} parent=1 // pred_check
      _
    $region27: #{tpu_custom_call.1} parent=1 // pred_check_branch
      %73 = sbr.rel (0) target = $region29
    $region28: #{tpu_custom_call.1} parent=1 // pred_region
      _
    $region29: #{tpu_custom_call.1} parent=1 // pred_fallthru
      _
    // Predicated region
    $region30: #{tpu_custom_call.1} parent=1 // pred_check
      _
    $region31: #{tpu_custom_call.1} parent=1 // pred_check_branch
      %75 = sbr.rel (0) target = $region33
    $region32: #{tpu_custom_call.1} parent=1 // pred_region
      %77 = dma.done [#allocation3], 2048
    $region33: #{tpu_custom_call.1} parent=1 // pred_fallthru
      _
    // Predicated region
    $region34: #{tpu_custom_call.1} parent=1 // pred_check
      _
    $region35: #{tpu_custom_call.1} parent=1 // pred_check_branch
      %79 = sbr.rel (0) target = $region37
    $region36: #{tpu_custom_call.1} parent=1 // pred_region
      %81 = dma.done [#allocation6], 8192
    $region37: #{tpu_custom_call.1} parent=1 // pred_fallthru
      _
    // Predicated region
    $region38: #{tpu_custom_call.1} parent=1 // pred_check
      _
    $region39: #{tpu_custom_call.1} parent=1 // pred_check_branch
      %83 = sbr.rel (0) target = $region41
    $region40: #{tpu_custom_call.1} parent=1 // pred_region
      %85 = dma.done [#allocation6], 1024
    $region41: #{tpu_custom_call.1} parent=1 // pred_fallthru
      _
    // Predicated region
    $region42: #{tpu_custom_call.1} parent=1 // pred_check
      _
    $region43: #{tpu_custom_call.1} parent=1 // pred_check_branch
      %87 = sbr.rel (0) target = $region45
    $region44: #{tpu_custom_call.1} parent=1 // pred_region
      %89 = dma.done [#allocation9], 1024
    $region45: #{tpu_custom_call.1} parent=1 // pred_fallthru
      _
    %v90 = vld [vmem:[#allocation2] sm:$0xff]
    %v91 = vld [vmem:[#allocation2 + $0x8] sm:$0xff]
    %v92 = vld [vmem:[#allocation2 + $0x10] sm:$0xff]
    %v93 = vld [vmem:[#allocation2 + $0x18] sm:$0xff]
    %v94 = vld [vmem:[#allocation2 + $0x20] sm:$0xff]
    %v95 = vld [vmem:[#allocation2 + $0x28] sm:$0xff]
    %v96 = vld [vmem:[#allocation2 + $0x30] sm:$0xff]
    %v97 = vld [vmem:[#allocation2 + $0x38] sm:$0xff]
    %v98 = vld [vmem:[#allocation2 + $0x40] sm:$0xff]
    %v99 = vld [vmem:[#allocation2 + $0x48] sm:$0xff]
    %v100 = vld [vmem:[#allocation2 + $0x50] sm:$0xff]
    %v101 = vld [vmem:[#allocation2 + $0x58] sm:$0xff]
    %v102 = vld [vmem:[#allocation2 + $0x60] sm:$0xff]
    %v103 = vld [vmem:[#allocation2 + $0x68] sm:$0xff]
    %v104 = vld [vmem:[#allocation2 + $0x70] sm:$0xff]
    %v105 = vld [vmem:[#allocation2 + $0x78] sm:$0xff]
    %v106 = vpack.c.bf16 %v98, %v90
    %v107 = vpack.c.bf16 %v99, %v91
    %v108 = vpack.c.bf16 %v100, %v92
    %v109 = vpack.c.bf16 %v101, %v93
    %v110 = vpack.c.bf16 %v102, %v94
    %v111 = vpack.c.bf16 %v103, %v95
    %v112 = vpack.c.bf16 %v104, %v96
    %v113 = vpack.c.bf16 %v105, %v97
    %v114 = vld [vmem:[#allocation5] sm:$0xf]
    %v115 = vld [vmem:[#allocation5 + $0x4] sm:$0xf]
    %v116 = vld [vmem:[#allocation5 + $0x8] sm:$0xf]
    %v117 = vld [vmem:[#allocation5 + $0xc] sm:$0xf]
    %v118 = vld [vmem:[#allocation5 + $0x10] sm:$0xf]
    %v119 = vld [vmem:[#allocation5 + $0x14] sm:$0xf]
    %v120 = vld [vmem:[#allocation5 + $0x18] sm:$0xf]
    %v121 = vld [vmem:[#allocation5 + $0x1c] sm:$0xf]
    %v122 = vld [vmem:[#allocation5 + $0x20] sm:$0xf]
    %v123 = vld [vmem:[#allocation5 + $0x24] sm:$0xf]
    %v124 = vld [vmem:[#allocation5 + $0x28] sm:$0xf]
    %v125 = vld [vmem:[#allocation5 + $0x2c] sm:$0xf]
    %v126 = vld [vmem:[#allocation5 + $0x30] sm:$0xf]
    %v127 = vld [vmem:[#allocation5 + $0x34] sm:$0xf]
    %v128 = vld [vmem:[#allocation5 + $0x38] sm:$0xf]
    %v129 = vld [vmem:[#allocation5 + $0x3c] sm:$0xf]
    %v130 = vld [vmem:[#allocation5 + $0x40] sm:$0xf]
    %v131 = vld [vmem:[#allocation5 + $0x44] sm:$0xf]
    %v132 = vld [vmem:[#allocation5 + $0x48] sm:$0xf]
    %v133 = vld [vmem:[#allocation5 + $0x4c] sm:$0xf]
    %v134 = vld [vmem:[#allocation5 + $0x50] sm:$0xf]
    %v135 = vld [vmem:[#allocation5 + $0x54] sm:$0xf]
    %v136 = vld [vmem:[#allocation5 + $0x58] sm:$0xf]
    %v137 = vld [vmem:[#allocation5 + $0x5c] sm:$0xf]
    %v138 = vld [vmem:[#allocation5 + $0x60] sm:$0xf]
    %v139 = vld [vmem:[#allocation5 + $0x64] sm:$0xf]
    %v140 = vld [vmem:[#allocation5 + $0x68] sm:$0xf]
    %v141 = vld [vmem:[#allocation5 + $0x6c] sm:$0xf]
    %v142 = vld [vmem:[#allocation5 + $0x70] sm:$0xf]
    %v143 = vld [vmem:[#allocation5 + $0x74] sm:$0xf]
    %v144 = vld [vmem:[#allocation5 + $0x78] sm:$0xf]
    %v145 = vld [vmem:[#allocation5 + $0x7c] sm:$0xf]
    %v146 = vld [vmem:[#allocation5 + $0x80] sm:$0xf]
    %v147 = vld [vmem:[#allocation5 + $0x84] sm:$0xf]
    %v148 = vld [vmem:[#allocation5 + $0x88] sm:$0xf]
    %v149 = vld [vmem:[#allocation5 + $0x8c] sm:$0xf]
    %v150 = vld [vmem:[#allocation5 + $0x90] sm:$0xf]
    %v151 = vld [vmem:[#allocation5 + $0x94] sm:$0xf]
    %v152 = vld [vmem:[#allocation5 + $0x98] sm:$0xf]
    %v153 = vld [vmem:[#allocation5 + $0x9c] sm:$0xf]
    %v154 = vld [vmem:[#allocation5 + $0xa0] sm:$0xf]
    %v155 = vld [vmem:[#allocation5 + $0xa4] sm:$0xf]
    %v156 = vld [vmem:[#allocation5 + $0xa8] sm:$0xf]
    %v157 = vld [vmem:[#allocation5 + $0xac] sm:$0xf]
    %v158 = vld [vmem:[#allocation5 + $0xb0] sm:$0xf]
    %v159 = vld [vmem:[#allocation5 + $0xb4] sm:$0xf]
    %v160 = vld [vmem:[#allocation5 + $0xb8] sm:$0xf]
    %v161 = vld [vmem:[#allocation5 + $0xbc] sm:$0xf]
    %v162 = vld [vmem:[#allocation5 + $0xc0] sm:$0xf]
    %v163 = vld [vmem:[#allocation5 + $0xc4] sm:$0xf]
    %v164 = vld [vmem:[#allocation5 + $0xc8] sm:$0xf]
    %v165 = vld [vmem:[#allocation5 + $0xcc] sm:$0xf]
    %v166 = vld [vmem:[#allocation5 + $0xd0] sm:$0xf]
    %v167 = vld [vmem:[#allocation5 + $0xd4] sm:$0xf]
    %v168 = vld [vmem:[#allocation5 + $0xd8] sm:$0xf]
    %v169 = vld [vmem:[#allocation5 + $0xdc] sm:$0xf]
    %v170 = vld [vmem:[#allocation5 + $0xe0] sm:$0xf]
    %v171 = vld [vmem:[#allocation5 + $0xe4] sm:$0xf]
    %v172 = vld [vmem:[#allocation5 + $0xe8] sm:$0xf]
    %v173 = vld [vmem:[#allocation5 + $0xec] sm:$0xf]
    %v174 = vld [vmem:[#allocation5 + $0xf0] sm:$0xf]
    %v175 = vld [vmem:[#allocation5 + $0xf4] sm:$0xf]
    %v176 = vld [vmem:[#allocation5 + $0xf8] sm:$0xf]
    %v177 = vld [vmem:[#allocation5 + $0xfc] sm:$0xf]
    %v178 = vld [vmem:[#allocation5 + $0x100] sm:$0xf]
    %v179 = vld [vmem:[#allocation5 + $0x104] sm:$0xf]
    %v180 = vld [vmem:[#allocation5 + $0x108] sm:$0xf]
    %v181 = vld [vmem:[#allocation5 + $0x10c] sm:$0xf]
    %v182 = vld [vmem:[#allocation5 + $0x110] sm:$0xf]
    %v183 = vld [vmem:[#allocation5 + $0x114] sm:$0xf]
    %v184 = vld [vmem:[#allocation5 + $0x118] sm:$0xf]
    %v185 = vld [vmem:[#allocation5 + $0x11c] sm:$0xf]
    %v186 = vld [vmem:[#allocation5 + $0x120] sm:$0xf]
    %v187 = vld [vmem:[#allocation5 + $0x124] sm:$0xf]
    %v188 = vld [vmem:[#allocation5 + $0x128] sm:$0xf]
    %v189 = vld [vmem:[#allocation5 + $0x12c] sm:$0xf]
    %v190 = vld [vmem:[#allocation5 + $0x130] sm:$0xf]
    %v191 = vld [vmem:[#allocation5 + $0x134] sm:$0xf]
    %v192 = vld [vmem:[#allocation5 + $0x138] sm:$0xf]
    %v193 = vld [vmem:[#allocation5 + $0x13c] sm:$0xf]
    %v194 = vld [vmem:[#allocation5 + $0x140] sm:$0xf]
    %v195 = vld [vmem:[#allocation5 + $0x144] sm:$0xf]
    %v196 = vld [vmem:[#allocation5 + $0x148] sm:$0xf]
    %v197 = vld [vmem:[#allocation5 + $0x14c] sm:$0xf]
    %v198 = vld [vmem:[#allocation5 + $0x150] sm:$0xf]
    %v199 = vld [vmem:[#allocation5 + $0x154] sm:$0xf]
    %v200 = vld [vmem:[#allocation5 + $0x158] sm:$0xf]
    %v201 = vld [vmem:[#allocation5 + $0x15c] sm:$0xf]
    %v202 = vld [vmem:[#allocation5 + $0x160] sm:$0xf]
    %v203 = vld [vmem:[#allocation5 + $0x164] sm:$0xf]
    %v204 = vld [vmem:[#allocation5 + $0x168] sm:$0xf]
    %v205 = vld [vmem:[#allocation5 + $0x16c] sm:$0xf]
    %v206 = vld [vmem:[#allocation5 + $0x170] sm:$0xf]
    %v207 = vld [vmem:[#allocation5 + $0x174] sm:$0xf]
    %v208 = vld [vmem:[#allocation5 + $0x178] sm:$0xf]
    %v209 = vld [vmem:[#allocation5 + $0x17c] sm:$0xf]
    %v210 = vld [vmem:[#allocation5 + $0x180] sm:$0xf]
    %v211 = vld [vmem:[#allocation5 + $0x184] sm:$0xf]
    %v212 = vld [vmem:[#allocation5 + $0x188] sm:$0xf]
    %v213 = vld [vmem:[#allocation5 + $0x18c] sm:$0xf]
    %v214 = vld [vmem:[#allocation5 + $0x190] sm:$0xf]
    %v215 = vld [vmem:[#allocation5 + $0x194] sm:$0xf]
    %v216 = vld [vmem:[#allocation5 + $0x198] sm:$0xf]
    %v217 = vld [vmem:[#allocation5 + $0x19c] sm:$0xf]
    %v218 = vld [vmem:[#allocation5 + $0x1a0] sm:$0xf]
    %v219 = vld [vmem:[#allocation5 + $0x1a4] sm:$0xf]
    %v220 = vld [vmem:[#allocation5 + $0x1a8] sm:$0xf]
    %v221 = vld [vmem:[#allocation5 + $0x1ac] sm:$0xf]
    %v222 = vld [vmem:[#allocation5 + $0x1b0] sm:$0xf]
    %v223 = vld [vmem:[#allocation5 + $0x1b4] sm:$0xf]
    %v224 = vld [vmem:[#allocation5 + $0x1b8] sm:$0xf]
    %v225 = vld [vmem:[#allocation5 + $0x1bc] sm:$0xf]
    %v226 = vld [vmem:[#allocation5 + $0x1c0] sm:$0xf]
    %v227 = vld [vmem:[#allocation5 + $0x1c4] sm:$0xf]
    %v228 = vld [vmem:[#allocation5 + $0x1c8] sm:$0xf]
    %v229 = vld [vmem:[#allocation5 + $0x1cc] sm:$0xf]
    %v230 = vld [vmem:[#allocation5 + $0x1d0] sm:$0xf]
    %v231 = vld [vmem:[#allocation5 + $0x1d4] sm:$0xf]
    %v232 = vld [vmem:[#allocation5 + $0x1d8] sm:$0xf]
    %v233 = vld [vmem:[#allocation5 + $0x1dc] sm:$0xf]
    %v234 = vld [vmem:[#allocation5 + $0x1e0] sm:$0xf]
    %v235 = vld [vmem:[#allocation5 + $0x1e4] sm:$0xf]
    %v236 = vld [vmem:[#allocation5 + $0x1e8] sm:$0xf]
    %v237 = vld [vmem:[#allocation5 + $0x1ec] sm:$0xf]
    %v238 = vld [vmem:[#allocation5 + $0x1f0] sm:$0xf]
    %v239 = vld [vmem:[#allocation5 + $0x1f4] sm:$0xf]
    %v240 = vld [vmem:[#allocation5 + $0x1f8] sm:$0xf]
    %v241 = vld [vmem:[#allocation5 + $0x1fc] sm:$0xf]
    %v242 = vld [vmem:[%s2] sm:$0x1]
    %v244 = vperm.slane %v242, 0
    %v374 = vunpack.c.l.b16 %v114
    %v375 = vunpack.c.l.b16 %v115
    %v376 = vunpack.c.l.b16 %v116
    %v377 = vunpack.c.l.b16 %v117
    %v378 = vunpack.c.l.b16 %v118
    %v379 = vunpack.c.l.b16 %v119
    %v380 = vunpack.c.l.b16 %v120
    %v381 = vunpack.c.l.b16 %v121
    %v382 = vunpack.c.l.b16 %v122
    %v383 = vunpack.c.l.b16 %v123
    %v384 = vunpack.c.l.b16 %v124
    %v385 = vunpack.c.l.b16 %v125
    %v386 = vunpack.c.l.b16 %v126
    %v387 = vunpack.c.l.b16 %v127
    %v388 = vunpack.c.l.b16 %v128
    %v389 = vunpack.c.l.b16 %v129
    %v390 = vunpack.c.l.b16 %v130
    %v391 = vunpack.c.l.b16 %v131
    %v392 = vunpack.c.l.b16 %v132
    %v393 = vunpack.c.l.b16 %v133
    %v394 = vunpack.c.l.b16 %v134
    %v395 = vunpack.c.l.b16 %v135
    %v396 = vunpack.c.l.b16 %v136
    %v397 = vunpack.c.l.b16 %v137
    %v398 = vunpack.c.l.b16 %v138
    %v399 = vunpack.c.l.b16 %v139
    %v400 = vunpack.c.l.b16 %v140
    %v401 = vunpack.c.l.b16 %v141
    %v402 = vunpack.c.l.b16 %v142
    %v403 = vunpack.c.l.b16 %v143
    %v404 = vunpack.c.l.b16 %v144
    %v405 = vunpack.c.l.b16 %v145
    %v406 = vunpack.c.l.b16 %v146
    %v407 = vunpack.c.l.b16 %v147
    %v408 = vunpack.c.l.b16 %v148
    %v409 = vunpack.c.l.b16 %v149
    %v410 = vunpack.c.l.b16 %v150
    %v411 = vunpack.c.l.b16 %v151
    %v412 = vunpack.c.l.b16 %v152
    %v413 = vunpack.c.l.b16 %v153
    %v414 = vunpack.c.l.b16 %v154
    %v415 = vunpack.c.l.b16 %v155
    %v416 = vunpack.c.l.b16 %v156
    %v417 = vunpack.c.l.b16 %v157
    %v418 = vunpack.c.l.b16 %v158
    %v419 = vunpack.c.l.b16 %v159
    %v420 = vunpack.c.l.b16 %v160
    %v421 = vunpack.c.l.b16 %v161
    %v422 = vunpack.c.l.b16 %v162
    %v423 = vunpack.c.l.b16 %v163
    %v424 = vunpack.c.l.b16 %v164
    %v425 = vunpack.c.l.b16 %v165
    %v426 = vunpack.c.l.b16 %v166
    %v427 = vunpack.c.l.b16 %v167
    %v428 = vunpack.c.l.b16 %v168
    %v429 = vunpack.c.l.b16 %v169
    %v430 = vunpack.c.l.b16 %v170
    %v431 = vunpack.c.l.b16 %v171
    %v432 = vunpack.c.l.b16 %v172
    %v433 = vunpack.c.l.b16 %v173
    %v434 = vunpack.c.l.b16 %v174
    %v435 = vunpack.c.l.b16 %v175
    %v436 = vunpack.c.l.b16 %v176
    %v437 = vunpack.c.l.b16 %v177
    %v438 = vunpack.c.l.b16 %v178
    %v439 = vunpack.c.l.b16 %v179
    %v440 = vunpack.c.l.b16 %v180
    %v441 = vunpack.c.l.b16 %v181
    %v442 = vunpack.c.l.b16 %v182
    %v443 = vunpack.c.l.b16 %v183
    %v444 = vunpack.c.l.b16 %v184
    %v445 = vunpack.c.l.b16 %v185
    %v446 = vunpack.c.l.b16 %v186
    %v447 = vunpack.c.l.b16 %v187
    %v448 = vunpack.c.l.b16 %v188
    %v449 = vunpack.c.l.b16 %v189
    %v450 = vunpack.c.l.b16 %v190
    %v451 = vunpack.c.l.b16 %v191
    %v452 = vunpack.c.l.b16 %v192
    %v453 = vunpack.c.l.b16 %v193
    %v454 = vunpack.c.l.b16 %v194
    %v455 = vunpack.c.l.b16 %v195
    %v456 = vunpack.c.l.b16 %v196
    %v457 = vunpack.c.l.b16 %v197
    %v458 = vunpack.c.l.b16 %v198
    %v459 = vunpack.c.l.b16 %v199
    %v460 = vunpack.c.l.b16 %v200
    %v461 = vunpack.c.l.b16 %v201
    %v462 = vunpack.c.l.b16 %v202
    %v463 = vunpack.c.l.b16 %v203
    %v464 = vunpack.c.l.b16 %v204
    %v465 = vunpack.c.l.b16 %v205
    %v466 = vunpack.c.l.b16 %v206
    %v467 = vunpack.c.l.b16 %v207
    %v468 = vunpack.c.l.b16 %v208
    %v469 = vunpack.c.l.b16 %v209
    %v470 = vunpack.c.l.b16 %v210
    %v471 = vunpack.c.l.b16 %v211
    %v472 = vunpack.c.l.b16 %v212
    %v473 = vunpack.c.l.b16 %v213
    %v474 = vunpack.c.l.b16 %v214
    %v475 = vunpack.c.l.b16 %v215
    %v476 = vunpack.c.l.b16 %v216
    %v477 = vunpack.c.l.b16 %v217
    %v478 = vunpack.c.l.b16 %v218
    %v479 = vunpack.c.l.b16 %v219
    %v480 = vunpack.c.l.b16 %v220
    %v481 = vunpack.c.l.b16 %v221
    %v482 = vunpack.c.l.b16 %v222
    %v483 = vunpack.c.l.b16 %v223
    %v484 = vunpack.c.l.b16 %v224
    %v485 = vunpack.c.l.b16 %v225
    %v486 = vunpack.c.l.b16 %v226
    %v487 = vunpack.c.l.b16 %v227
    %v488 = vunpack.c.l.b16 %v228
    %v489 = vunpack.c.l.b16 %v229
    %v490 = vunpack.c.l.b16 %v230
    %v491 = vunpack.c.l.b16 %v231
    %v492 = vunpack.c.l.b16 %v232
    %v493 = vunpack.c.l.b16 %v233
    %v494 = vunpack.c.l.b16 %v234
    %v495 = vunpack.c.l.b16 %v235
    %v496 = vunpack.c.l.b16 %v236
    %v497 = vunpack.c.l.b16 %v237
    %v498 = vunpack.c.l.b16 %v238
    %v499 = vunpack.c.l.b16 %v239
    %v500 = vunpack.c.l.b16 %v240
    %v501 = vunpack.c.l.b16 %v241
    %v502 = vpack.c.b16 %v375, %v374
    %v503 = vpack.c.b16 %v377, %v376
    %v504 = vpack.c.b16 %v379, %v378
    %v505 = vpack.c.b16 %v381, %v380
    %v506 = vpack.c.b16 %v383, %v382
    %v507 = vpack.c.b16 %v385, %v384
    %v508 = vpack.c.b16 %v387, %v386
    %v509 = vpack.c.b16 %v389, %v388
    %v510 = vpack.c.b16 %v391, %v390
    %v511 = vpack.c.b16 %v393, %v392
    %v512 = vpack.c.b16 %v395, %v394
    %v513 = vpack.c.b16 %v397, %v396
    %v514 = vpack.c.b16 %v399, %v398
    %v515 = vpack.c.b16 %v401, %v400
    %v516 = vpack.c.b16 %v403, %v402
    %v517 = vpack.c.b16 %v405, %v404
    %v518 = vpack.c.b16 %v407, %v406
    %v519 = vpack.c.b16 %v409, %v408
    %v520 = vpack.c.b16 %v411, %v410
    %v521 = vpack.c.b16 %v413, %v412
    %v522 = vpack.c.b16 %v415, %v414
    %v523 = vpack.c.b16 %v417, %v416
    %v524 = vpack.c.b16 %v419, %v418
    %v525 = vpack.c.b16 %v421, %v420
    %v526 = vpack.c.b16 %v423, %v422
    %v527 = vpack.c.b16 %v425, %v424
    %v528 = vpack.c.b16 %v427, %v426
    %v529 = vpack.c.b16 %v429, %v428
    %v530 = vpack.c.b16 %v431, %v430
    %v531 = vpack.c.b16 %v433, %v432
    %v532 = vpack.c.b16 %v435, %v434
    %v533 = vpack.c.b16 %v437, %v436
    %v534 = vpack.c.b16 %v439, %v438
    %v535 = vpack.c.b16 %v441, %v440
    %v536 = vpack.c.b16 %v443, %v442
    %v537 = vpack.c.b16 %v445, %v444
    %v538 = vpack.c.b16 %v447, %v446
    %v539 = vpack.c.b16 %v449, %v448
    %v540 = vpack.c.b16 %v451, %v450
    %v541 = vpack.c.b16 %v453, %v452
    %v542 = vpack.c.b16 %v455, %v454
    %v543 = vpack.c.b16 %v457, %v456
    %v544 = vpack.c.b16 %v459, %v458
    %v545 = vpack.c.b16 %v461, %v460
    %v546 = vpack.c.b16 %v463, %v462
    %v547 = vpack.c.b16 %v465, %v464
    %v548 = vpack.c.b16 %v467, %v466
    %v549 = vpack.c.b16 %v469, %v468
    %v550 = vpack.c.b16 %v471, %v470
    %v551 = vpack.c.b16 %v473, %v472
    %v552 = vpack.c.b16 %v475, %v474
    %v553 = vpack.c.b16 %v477, %v476
    %v554 = vpack.c.b16 %v479, %v478
    %v555 = vpack.c.b16 %v481, %v480
    %v556 = vpack.c.b16 %v483, %v482
    %v557 = vpack.c.b16 %v485, %v484
    %v558 = vpack.c.b16 %v487, %v486
    %v559 = vpack.c.b16 %v489, %v488
    %v560 = vpack.c.b16 %v491, %v490
    %v561 = vpack.c.b16 %v493, %v492
    %v562 = vpack.c.b16 %v495, %v494
    %v563 = vpack.c.b16 %v497, %v496
    %v564 = vpack.c.b16 %v499, %v498
    %v565 = vpack.c.b16 %v501, %v500
    %630 = vmatpush.bf16.msra.mxu0 %v509
    %631 = vmatpush.bf16.msra.mxu0 %v508
    %632 = vmatpush.bf16.msra.mxu0 %v507
    %633 = vmatpush.bf16.msra.mxu0 %v506
    %634 = vmatpush.bf16.msra.mxu0 %v505
    %635 = vmatpush.bf16.msra.mxu0 %v504
    %636 = vmatpush.bf16.msra.mxu0 %v503
    %637 = vmatpush.bf16.msra.mxu0 %v502
    %638 = vmatmul.bf16.gmra.mxu0 %v106
    %v639 = vpop.f32.mrf.mxu0
    %v640 = vadd.f32 %v244, %v639
    %v641 = vpop.f32.mrf.mxu0
    %v642 = vadd.f32 %v244, %v641
    %643 = vdwg.mxu0
    %644 = vmatpush.bf16.msra.mxu0 %v517
    %645 = vmatpush.bf16.msra.mxu0 %v516
    %646 = vmatpush.bf16.msra.mxu0 %v515
    %647 = vmatpush.bf16.msra.mxu0 %v514
    %648 = vmatpush.bf16.msra.mxu0 %v513
    %649 = vmatpush.bf16.msra.mxu0 %v512
    %650 = vmatpush.bf16.msra.mxu0 %v511
    %651 = vmatpush.bf16.msra.mxu0 %v510
    %652 = vmatmul.bf16.gmra.mxu0 %v107
    %v653 = vpop.f32.mrf.mxu0
    %v654 = vadd.f32 %v640, %v653
    %v655 = vpop.f32.mrf.mxu0
    %v656 = vadd.f32 %v642, %v655
    %657 = vdwg.mxu0
    %658 = vmatpush.bf16.msra.mxu0 %v525
    %659 = vmatpush.bf16.msra.mxu0 %v524
    %660 = vmatpush.bf16.msra.mxu0 %v523
    %661 = vmatpush.bf16.msra.mxu0 %v522
    %662 = vmatpush.bf16.msra.mxu0 %v521
    %663 = vmatpush.bf16.msra.mxu0 %v520
    %664 = vmatpush.bf16.msra.mxu0 %v519
    %665 = vmatpush.bf16.msra.mxu0 %v518
    %666 = vmatmul.bf16.gmra.mxu0 %v108
    %v667 = vpop.f32.mrf.mxu0
    %v668 = vadd.f32 %v654, %v667
    %v669 = vpop.f32.mrf.mxu0
    %v670 = vadd.f32 %v656, %v669
    %671 = vdwg.mxu0
    %672 = vmatpush.bf16.msra.mxu0 %v533
    %673 = vmatpush.bf16.msra.mxu0 %v532
    %674 = vmatpush.bf16.msra.mxu0 %v531
    %675 = vmatpush.bf16.msra.mxu0 %v530
    %676 = vmatpush.bf16.msra.mxu0 %v529
    %677 = vmatpush.bf16.msra.mxu0 %v528
    %678 = vmatpush.bf16.msra.mxu0 %v527
    %679 = vmatpush.bf16.msra.mxu0 %v526
    %680 = vmatmul.bf16.gmra.mxu0 %v109
    %v681 = vpop.f32.mrf.mxu0
    %v682 = vadd.f32 %v668, %v681
    %v683 = vpop.f32.mrf.mxu0
    %v684 = vadd.f32 %v670, %v683
    %685 = vdwg.mxu0
    %686 = vmatpush.bf16.msra.mxu0 %v541
    %687 = vmatpush.bf16.msra.mxu0 %v540
    %688 = vmatpush.bf16.msra.mxu0 %v539
    %689 = vmatpush.bf16.msra.mxu0 %v538
    %690 = vmatpush.bf16.msra.mxu0 %v537
    %691 = vmatpush.bf16.msra.mxu0 %v536
    %692 = vmatpush.bf16.msra.mxu0 %v535
    %693 = vmatpush.bf16.msra.mxu0 %v534
    %694 = vmatmul.bf16.gmra.mxu0 %v110
    %v695 = vpop.f32.mrf.mxu0
    %v696 = vadd.f32 %v682, %v695
    %v697 = vpop.f32.mrf.mxu0
    %v698 = vadd.f32 %v684, %v697
    %699 = vdwg.mxu0
    %700 = vmatpush.bf16.msra.mxu0 %v549
    %701 = vmatpush.bf16.msra.mxu0 %v548
    %702 = vmatpush.bf16.msra.mxu0 %v547
    %703 = vmatpush.bf16.msra.mxu0 %v546
    %704 = vmatpush.bf16.msra.mxu0 %v545
    %705 = vmatpush.bf16.msra.mxu0 %v544
    %706 = vmatpush.bf16.msra.mxu0 %v543
    %707 = vmatpush.bf16.msra.mxu0 %v542
    %708 = vmatmul.bf16.gmra.mxu0 %v111
    %v709 = vpop.f32.mrf.mxu0
    %v710 = vadd.f32 %v696, %v709
    %v711 = vpop.f32.mrf.mxu0
    %v712 = vadd.f32 %v698, %v711
    %713 = vdwg.mxu0
    %714 = vmatpush.bf16.msra.mxu0 %v557
    %715 = vmatpush.bf16.msra.mxu0 %v556
    %716 = vmatpush.bf16.msra.mxu0 %v555
    %717 = vmatpush.bf16.msra.mxu0 %v554
    %718 = vmatpush.bf16.msra.mxu0 %v553
    %719 = vmatpush.bf16.msra.mxu0 %v552
    %720 = vmatpush.bf16.msra.mxu0 %v551
    %721 = vmatpush.bf16.msra.mxu0 %v550
    %722 = vmatmul.bf16.gmra.mxu0 %v112
    %v723 = vpop.f32.mrf.mxu0
    %v724 = vadd.f32 %v710, %v723
    %v725 = vpop.f32.mrf.mxu0
    %v726 = vadd.f32 %v712, %v725
    %727 = vdwg.mxu0
    %728 = vmatpush.bf16.msra.mxu0 %v565
    %729 = vmatpush.bf16.msra.mxu0 %v564
    %730 = vmatpush.bf16.msra.mxu0 %v563
    %731 = vmatpush.bf16.msra.mxu0 %v562
    %732 = vmatpush.bf16.msra.mxu0 %v561
    %733 = vmatpush.bf16.msra.mxu0 %v560
    %734 = vmatpush.bf16.msra.mxu0 %v559
    %735 = vmatpush.bf16.msra.mxu0 %v558
    %736 = vmatmul.bf16.gmra.mxu0 %v113
    %v737 = vpop.f32.mrf.mxu0
    %v738 = vadd.f32 %v724, %v737
    %v739 = vpop.f32.mrf.mxu0
    %v740 = vadd.f32 %v726, %v739
    %741 = vdwg.mxu0
    %v742 = vmax.f32 %v738, 0.0
    %v743 = vmax.f32 %v740, 0.0
    %v744 = vpack.c.bf16 %v743, %v742
    %v745 = vld [vmem:[#allocation7] sm:$0xf]
    %v746 = vld [vmem:[#allocation7 + $0x4] sm:$0xf]
    %v747 = vld [vmem:[#allocation7 + $0x8] sm:$0xf]
    %v748 = vld [vmem:[#allocation7 + $0xc] sm:$0xf]
    %v749 = vld [vmem:[#allocation7 + $0x10] sm:$0xf]
    %v750 = vld [vmem:[#allocation7 + $0x14] sm:$0xf]
    %v751 = vld [vmem:[#allocation7 + $0x18] sm:$0xf]
    %v752 = vld [vmem:[#allocation7 + $0x1c] sm:$0xf]
    %v753 = vld [vmem:[#allocation7 + $0x20] sm:$0xf]
    %v754 = vld [vmem:[#allocation7 + $0x24] sm:$0xf]
    %v755 = vld [vmem:[#allocation7 + $0x28] sm:$0xf]
    %v756 = vld [vmem:[#allocation7 + $0x2c] sm:$0xf]
    %v757 = vld [vmem:[#allocation7 + $0x30] sm:$0xf]
    %v758 = vld [vmem:[#allocation7 + $0x34] sm:$0xf]
    %v759 = vld [vmem:[#allocation7 + $0x38] sm:$0xf]
    %v760 = vld [vmem:[#allocation7 + $0x3c] sm:$0xf]
    %v761 = vld [vmem:[%s4] sm:$0x1]
    %v763 = vperm.slane %v761, 0
    %v781 = vunpack.c.l.b16 %v745
    %v782 = vunpack.c.l.b16 %v746
    %v783 = vunpack.c.l.b16 %v747
    %v784 = vunpack.c.l.b16 %v748
    %v785 = vunpack.c.l.b16 %v749
    %v786 = vunpack.c.l.b16 %v750
    %v787 = vunpack.c.l.b16 %v751
    %v788 = vunpack.c.l.b16 %v752
    %v789 = vunpack.c.l.b16 %v753
    %v790 = vunpack.c.l.b16 %v754
    %v791 = vunpack.c.l.b16 %v755
    %v792 = vunpack.c.l.b16 %v756
    %v793 = vunpack.c.l.b16 %v757
    %v794 = vunpack.c.l.b16 %v758
    %v795 = vunpack.c.l.b16 %v759
    %v796 = vunpack.c.l.b16 %v760
    %v797 = vpack.c.b16 %v782, %v781
    %v798 = vpack.c.b16 %v784, %v783
    %v799 = vpack.c.b16 %v786, %v785
    %v800 = vpack.c.b16 %v788, %v787
    %v801 = vpack.c.b16 %v790, %v789
    %v802 = vpack.c.b16 %v792, %v791
    %v803 = vpack.c.b16 %v794, %v793
    %v804 = vpack.c.b16 %v796, %v795
    %813 = vmatpush.bf16.msra.mxu0 %v804
    %814 = vmatpush.bf16.msra.mxu0 %v803
    %815 = vmatpush.bf16.msra.mxu0 %v802
    %816 = vmatpush.bf16.msra.mxu0 %v801
    %817 = vmatpush.bf16.msra.mxu0 %v800
    %818 = vmatpush.bf16.msra.mxu0 %v799
    %819 = vmatpush.bf16.msra.mxu0 %v798
    %820 = vmatpush.bf16.msra.mxu0 %v797
    %821 = vmatmul.bf16.gmra.mxu0 %v744
    %v822 = vpop.f32.mrf.mxu0
    %v823 = vadd.f32 %v763, %v822
    %v824 = vpop.f32.mrf.mxu0
    %v825 = vadd.f32 %v763, %v824
    %826 = vdwg.mxu0
    %v827 = vmax.f32 %v823, 0.0
    %v828 = vmax.f32 %v825, 0.0
    %v829 = vpack.c.bf16 %v828, %v827
    %v830 = vld [vmem:[#allocation8] sm:$0xf]
    %v831 = vld [vmem:[#allocation8 + $0x4] sm:$0xf]
    %v832 = vld [vmem:[#allocation8 + $0x8] sm:$0xf]
    %v833 = vld [vmem:[#allocation8 + $0xc] sm:$0xf]
    %v834 = vld [vmem:[#allocation8 + $0x10] sm:$0xf]
    %v835 = vld [vmem:[#allocation8 + $0x14] sm:$0xf]
    %v836 = vld [vmem:[#allocation8 + $0x18] sm:$0xf]
    %v837 = vld [vmem:[#allocation8 + $0x1c] sm:$0xf]
    %v838 = vld [vmem:[#allocation8 + $0x20] sm:$0xf]
    %v839 = vld [vmem:[#allocation8 + $0x24] sm:$0xf]
    %v840 = vld [vmem:[#allocation8 + $0x28] sm:$0xf]
    %v841 = vld [vmem:[#allocation8 + $0x2c] sm:$0xf]
    %v842 = vld [vmem:[#allocation8 + $0x30] sm:$0xf]
    %v843 = vld [vmem:[#allocation8 + $0x34] sm:$0xf]
    %v844 = vld [vmem:[#allocation8 + $0x38] sm:$0xf]
    %v845 = vld [vmem:[#allocation8 + $0x3c] sm:$0xf]
    %v846 = vld [vmem:[%s6] sm:$0x1]
    %v848 = vperm.slane %v846, 0
    %v866 = vunpack.c.l.b16 %v830
    %v867 = vunpack.c.l.b16 %v831
    %v868 = vunpack.c.l.b16 %v832
    %v869 = vunpack.c.l.b16 %v833
    %v870 = vunpack.c.l.b16 %v834
    %v871 = vunpack.c.l.b16 %v835
    %v872 = vunpack.c.l.b16 %v836
    %v873 = vunpack.c.l.b16 %v837
    %v874 = vunpack.c.l.b16 %v838
    %v875 = vunpack.c.l.b16 %v839
    %v876 = vunpack.c.l.b16 %v840
    %v877 = vunpack.c.l.b16 %v841
    %v878 = vunpack.c.l.b16 %v842
    %v879 = vunpack.c.l.b16 %v843
    %v880 = vunpack.c.l.b16 %v844
    %v881 = vunpack.c.l.b16 %v845
    %v882 = vpack.c.b16 %v867, %v866
    %v883 = vpack.c.b16 %v869, %v868
    %v884 = vpack.c.b16 %v871, %v870
    %v885 = vpack.c.b16 %v873, %v872
    %v886 = vpack.c.b16 %v875, %v874
    %v887 = vpack.c.b16 %v877, %v876
    %v888 = vpack.c.b16 %v879, %v878
    %v889 = vpack.c.b16 %v881, %v880
    %898 = vmatpush.bf16.msra.mxu0 %v889
    %899 = vmatpush.bf16.msra.mxu0 %v888
    %900 = vmatpush.bf16.msra.mxu0 %v887
    %901 = vmatpush.bf16.msra.mxu0 %v886
    %902 = vmatpush.bf16.msra.mxu0 %v885
    %903 = vmatpush.bf16.msra.mxu0 %v884
    %904 = vmatpush.bf16.msra.mxu0 %v883
    %905 = vmatpush.bf16.msra.mxu0 %v882
    %906 = vmatmul.bf16.gmra.mxu0 %v829
    %v907 = vpop.f32.mrf.mxu0
    %v908 = vadd.f32 %v848, %v907
    %v909 = vpop.f32.mrf.mxu0
    %v910 = vadd.f32 %v848, %v909
    %911 = vdwg.mxu0
    %912 = vmax.xlane.f32.xlu0 %v908
    %v913 = vpop.xlane.xlu0 %912
    %914 = vmax.xlane.f32.xlu0 %v910
    %v915 = vpop.xlane.xlu0 %914
    %v916 = vsub.f32 %v908, %v913
    %v917 = vsub.f32 %v910, %v915
    %v918 = vmul.f32 %v916, 1.442695
    %v919 = vpow.pop %v918
    %v920 = vmul.f32 %v917, 1.442695
    %v921 = vpow.pop %v920
    %922 = vadd.xlane.f32.xlu0 %v919
    %v923 = vpop.xlane.xlu0 %922
    %924 = vadd.xlane.f32.xlu0 %v921
    %v925 = vpop.xlane.xlu0 %924
    %v926 = vlog2.pop %v923
    %v927 = vmul.f32 %v926, 0.6931472
    %v928 = vlog2.pop %v925
    %v929 = vmul.f32 %v928, 0.6931472
    %v930 = vsub.f32 %v916, %v927
    %v931 = vsub.f32 %v917, %v929
    %932 = vst [vmem:[#allocation10] sm:$0xff] %v930
    %933 = vst [vmem:[#allocation10 + $0x8] sm:$0xff] %v931
    // Predicated region
    $region46: #{tpu_custom_call.1} parent=1 // pred_check
      _
    $region47: #{tpu_custom_call.1} parent=1 // pred_check_branch
      %935 = sbr.rel (0) target = $region49
    $region48: #{tpu_custom_call.1} parent=1 // pred_region
      %937 = vsyncadd [#allocation4], 0
      %s938 = sshll.u32 [#allocation10], 4
      %s939 = int_to_ptr.vmem [resolvable:$true] %s938
      %s940 = sshll.u32 %s7, 4
      %s941 = int_to_ptr.hbm [resolvable:$true] %s940
      %946 = dma.vmem_to_hbm [thread:$0]  %s939, 256, %s941, [#allocation4], 128, 128, 8
    $region49: #{tpu_custom_call.1} parent=1 // pred_fallthru
      _
    // Predicated region
    $region50: #{tpu_custom_call.1} parent=1 // pred_check
      _
    $region51: #{tpu_custom_call.1} parent=1 // pred_check_branch
      %948 = sbr.rel (0) target = $region53
    $region52: #{tpu_custom_call.1} parent=1 // pred_region
      %950 = dma.done [#allocation4], 256
    $region53: #{tpu_custom_call.1} parent=1 // pred_fallthru
      _
    %951 = vsyncpa [#allocation3], 1
    %952 = vsyncpa [#allocation6], 1
    %953 = vsyncpa [#allocation9], 1
    %954 = vsyncpa [#allocation4], 1

</llo_original>
